<compile_context>
chip_gen: v7x
topology: tpu7x:2x2x1
jax: 0.10.0
libtpu: 0.0.40
codegen_flags: <defaults>
</compile_context>

<pallas_src>
import jax
import jax.numpy as jnp
from jax.experimental import pallas as pl
from jax.experimental.pallas import tpu as pltpu

N_COEFFS = 16          # small n_coeffs for the example (module arg)
N_BASE = 160000        # hardcoded in the PyTorch module (fc2 out_features)
TILE_M = 32000         # 250 * 128; 160000 / 32000 = 5 grid steps
                       # (on v5e, 16000 is equally good; 32000 is safe everywhere)


def outer_kernel(x_ref, w1_ref, w2_ref, o_ref):
    # x_ref : SMEM (1,)            -- the scalar input x
    # w1_ref: VMEM (N_COEFFS, 1)   -- fc1 weight (full, grid-resident)
    # w2_ref: VMEM (1, TILE_M)     -- slice of fc2 weight (presented as a row)
    # o_ref : VMEM (N_COEFFS, TILE_M)
    s = x_ref[0] * x_ref[0]              # scalar x^2 (SMEM scalar math)
    coeffs = w1_ref[...] * s             # (N_COEFFS, 1): 16 muls, noise
    # Single broadcast multiply over the output tile == scaled outer product.
    o_ref[...] = coeffs * w2_ref[...]


def net_forward(x, w1, w2):
    """x: (1,) f32, w1: (N_COEFFS, 1) f32, w2: (N_BASE, 1) f32 -> (N_COEFFS, N_BASE)."""
    w2_row = w2.reshape(1, N_BASE)       # glue: present fc2 weight as a row
    grid = (N_BASE // TILE_M,)
    return pl.pallas_call(
        outer_kernel,
        out_shape=jax.ShapeDtypeStruct((N_COEFFS, N_BASE), jnp.float32),
        grid_spec=pltpu.PrefetchScalarGridSpec(
            num_scalar_prefetch=0,
            grid=grid,
            in_specs=[
                pl.BlockSpec(memory_space=pltpu.MemorySpace.SMEM),   # x (scalar)
                pl.BlockSpec((N_COEFFS, 1), lambda j: (0, 0)),       # w1, resident
                pl.BlockSpec((1, TILE_M), lambda j: (0, j)),         # w2 row tile
            ],
            out_specs=pl.BlockSpec((N_COEFFS, TILE_M), lambda j: (0, j)),
        ),
        compiler_params=pltpu.CompilerParams(
            dimension_semantics=("parallel",)),   # lets v7x megacore shard steps
    )(x, w1, w2_row)


if __name__ == "__main__":
    key = jax.random.PRNGKey(0)
    k1, k2, k3 = jax.random.split(key, 3)

    # Deterministic synthetic weights. PyTorch's default Linear init for
    # in_features=1 is U(-1, 1); mirror that.
    w1 = jax.random.uniform(k1, (N_COEFFS, 1), jnp.float32, -1.0, 1.0)
    w2 = jax.random.uniform(k2, (N_BASE, 1), jnp.float32, -1.0, 1.0)
    x = jax.random.normal(k3, (1,), jnp.float32)

    out = jax.block_until_ready(net_forward(x, w1, w2))

    # Pure-JAX reference of the PyTorch forward.
    coeffs = w1[:, 0] * x[0]                   # fc1(x)
    base = w2[:, 0] * x[0]                     # fc2(x)
    ref = coeffs[:, None] * base[None, :]      # outer product

    assert out.shape == (N_COEFFS, N_BASE), out.shape
    assert jnp.allclose(out, ref, rtol=1e-5, atol=1e-5)
    print("KERNEL_OK")
</pallas_src>

<mosaic_0001>
module attributes {stable_mosaic.version = 11 : i64} {
  func.func @outer_kernel(%arg0: i32, %arg1: memref<1xf32, #tpu.memory_space<smem>>, %arg2: memref<16x1xf32, #tpu.memory_space<vmem>>, %arg3: memref<1x32000xf32, #tpu.memory_space<vmem>>, %arg4: memref<16x32000xf32, #tpu.memory_space<vmem>>) attributes {dimension_semantics = [#tpu.dimension_semantics<parallel>], iteration_bounds = array<i64: 5>, scalar_prefetch = 0 : i64, scratch_operands = 0 : i64, tpu.core_type = #tpu.core_type<tc>, window_params = [{transform_indices = @transform_0, window_bounds = array<i64: 1>}, {pipeline_mode = #tpu.pipeline_mode<synchronous>, transform_indices = @transform_1, window_bounds = array<i64: 16, 1>}, {transform_indices = @transform_2, window_bounds = array<i64: 1, 32000>}, {transform_indices = @transform_3, window_bounds = array<i64: 16, 32000>}]} {
    %c0 = arith.constant 0 : index
    %0 = memref.load %arg1[%c0] : memref<1xf32, #tpu.memory_space<smem>>
    %c0_0 = arith.constant 0 : index
    %1 = memref.load %arg1[%c0_0] : memref<1xf32, #tpu.memory_space<smem>>
    %2 = arith.mulf %0, %1 : f32
    %c0_1 = arith.constant 0 : index
    %c0_2 = arith.constant 0 : index
    %3 = vector.load %arg2[%c0_1, %c0_2] : memref<16x1xf32, #tpu.memory_space<vmem>>, vector<16x1xf32>
    %4 = vector.broadcast %2 : f32 to vector<16x1xf32>
    %5 = arith.mulf %3, %4 : vector<16x1xf32>
    %c0_3 = arith.constant 0 : index
    %c0_4 = arith.constant 0 : index
    %6 = vector.load %arg3[%c0_3, %c0_4] : memref<1x32000xf32, #tpu.memory_space<vmem>>, vector<1x32000xf32>
    %7 = vector.broadcast %5 : vector<16x1xf32> to vector<16x32000xf32>
    %8 = vector.broadcast %6 : vector<1x32000xf32> to vector<16x32000xf32>
    %9 = arith.mulf %7, %8 : vector<16x32000xf32>
    %c0_5 = arith.constant 0 : index
    %c0_6 = arith.constant 0 : index
    %10 = vector.load %arg4[%c0_5, %c0_6] : memref<16x32000xf32, #tpu.memory_space<vmem>>, vector<16x32000xf32>
    tpu.vector_store %arg4[%c0_5, %c0_6], %9 {strides = array<i32>} : memref<16x32000xf32, #tpu.memory_space<vmem>>, vector<16x32000xf32>,
    return
  }
  func.func @transform_0(%arg0: i32) -> i32 {
    %c0_i32 = arith.constant 0 : i32
    %c0_i32_0 = arith.constant 0 : i32
    return %c0_i32 : i32
  }
  func.func @transform_1(%arg0: i32) -> (i32, i32) {
    %c0_i32 = arith.constant 0 : i32
    %c0_i32_0 = arith.constant 0 : i32
    %c0_i32_1 = arith.constant 0 : i32
    return %c0_i32, %c0_i32_0 : i32, i32
  }
  func.func @transform_2(%arg0: i32) -> (i32, i32) {
    %c0_i32 = arith.constant 0 : i32
    %c0_i32_0 = arith.constant 0 : i32
    return %c0_i32, %arg0 : i32, i32
  }
  func.func @transform_3(%arg0: i32) -> (i32, i32) {
    %c0_i32 = arith.constant 0 : i32
    %c0_i32_0 = arith.constant 0 : i32
    return %c0_i32, %arg0 : i32, i32
  }
}

</mosaic_0001>

<llo_original>
// kernel: tpu_custom_call.1
$region0: #{tpu_custom_call.1}
  #allocation0 [shape = 'u32[]', space=smem, size = 0x4, offset = 0x4, fixed_abs, tag = 'smem constant byte address 0x4 - core index']
  #allocation1 [shape = 'u32[144,128]{1,0:T(1,128)}', space=vmem, size = 0x12000, scoped, tag = 'internal scratch']
  #allocation2 [shape = 'f32[1]{0:T(128)S(6)}', space=smem, size = 0x200, scoped, tag = 'scoped memory for tpu_custom_call.1']
  %s0 = inlined_call_operand.<no memory space> [shape: f32[1], index: 0, kind: input, shape index: {}]
  %s1 = inlined_call_operand.vmem [shape: f32[16,1], index: 1, kind: input, shape index: {}]
  %s2 = inlined_call_operand.hbm [shape: f32[1,160000], index: 2, kind: input, shape index: {}]
  %s3 = inlined_call_operand.hbm [shape: f32[16,160000], index: 3, kind: output, shape index: {}]
  %s4 = sld [smem:[#allocation0]]
  $region49: #{tpu_custom_call.1} parent=0
    _
  %s6 = ssub.s32 1, %s4
  %s7 = scalar_select 0, %s6, %s4
  %8 = sst [smem:[#allocation2]] %s0
  $region1: #{tpu_custom_call.1} parent=0
    #allocation3 [shape = 'u8[256000]{0}', space=vmem, size = 0x3e800, scoped, tag = 'input window, operand 2']
    #allocation4 [shape = 's32[2]{0}', space=sflag, size = 0x8, scoped, tag = 'scoped memory for tpu_custom_call.1']
    #allocation5 [shape = 's32[2]{0}', space=sflag, size = 0x8, scoped, tag = 'scoped memory for tpu_custom_call.1']
    #allocation6 [shape = 'u8[4096000]{0}', space=vmem, size = 0x3e8000, scoped, tag = 'output window, operand 0']
    %9 = vsyncpa [#allocation4], 0
    %s10 = scalar_lea.sflag [#allocation4], 1
    %11 = vsyncpa %s10, 0
    %12 = vsyncpa [#allocation5], 0
    %s13 = scalar_lea.sflag [#allocation5], 1
    %14 = vsyncpa %s13, 0
    loop: start=0, step=1, limit=7
    $region2: #{tpu_custom_call.1} parent=1 // loop_pre_header
      _
    $region3: #{tpu_custom_call.1} parent=1 // loop_header
      %s16 = sphi 0, %s20
      %p17 = scmp.ge.s32.totalorder %s16, 7
      %s24 = sphi 0, %s24
      %s26 = sphi 0, %s24
      %s27 = sphi 0, %s26
      %s41 = sphi 0, %s27
      %s45 = sphi 0, %s45
      %s47 = sphi 0, %s45
      %s48 = sphi 0, %s47
      %s62 = sphi 0, %s48
      %s68 = sphi 0, %s70
      %s71 = sphi 0, %s68
      %s72 = sphi 0, %s71
      %s88 = sphi 0, %s72
      %s94 = sphi 0, %s96
      %s97 = sphi 0, %s94
      %s98 = sphi 0, %s97
      %s114 = sphi 0, %s98
    $region4: #{tpu_custom_call.1} parent=1 // loop_header_branch
      %19 = sbr.rel (%p17) target = $region8
    $region5: #{tpu_custom_call.1} parent=1 // loop_body
      %s21 = ssub.s32 %s16, 1
      %s22 = ssub.s32 %s16, 2
      %s23 = sadd.s32 %s16, 1
      %s25 = sadd.s32 %s24, 1
      %p28 = scmp.eq.s32.totalorder %s16, 4
      %p29 = scmp.ne.s32.totalorder %s24, %s26
      %p30 = scmp.eq.s32.totalorder %s16, 0
      %p31 = por %p29, %p30
      %p32 = scmp.ne.s32.totalorder %s24, %s26
      %p33 = scmp.eq.s32.totalorder %s21, 4
      %p34 = por %p32, %p33
      %p35 = scmp.ne.s32.totalorder %s26, %s27
      %p36 = scmp.eq.s32.totalorder %s21, 0
      %p37 = por %p35, %p36
      %p38 = scmp.ne.s32.totalorder %s26, %s27
      %p39 = scmp.eq.s32.totalorder %s22, 4
      %p40 = por %p38, %p39
      %p42 = scmp.ne.s32.totalorder %s27, %s41
      %p43 = scmp.eq.s32.totalorder %s22, 0
      %p44 = por %p42, %p43
      %s46 = sadd.s32 %s45, 1
      %p49 = scmp.eq.s32.totalorder %s16, 4
      %p50 = scmp.ne.s32.totalorder %s45, %s47
      %p51 = scmp.eq.s32.totalorder %s16, 0
      %p52 = por %p50, %p51
      %p53 = scmp.ne.s32.totalorder %s45, %s47
      %p54 = scmp.eq.s32.totalorder %s21, 4
      %p55 = por %p53, %p54
      %p56 = scmp.ne.s32.totalorder %s47, %s48
      %p57 = scmp.eq.s32.totalorder %s21, 0
      %p58 = por %p56, %p57
      %p59 = scmp.ne.s32.totalorder %s47, %s48
      %p60 = scmp.eq.s32.totalorder %s22, 4
      %p61 = por %p59, %p60
      %p63 = scmp.ne.s32.totalorder %s48, %s62
      %p64 = scmp.eq.s32.totalorder %s22, 0
      %p65 = por %p63, %p64
      %s66 = ssub.s32 %s16, %s23
      %p67 = scmp.eq.s32.totalorder %s66, 0
      %s69 = sadd.s32 %s68, 1
      %s70 = scalar_select %p67, %s68, %s69
      %p73 = pneg %p67
      %p74 = scmp.eq.s32.totalorder %s16, 4
      %p75 = por %p73, %p74
      %p76 = scmp.ne.s32.totalorder %s68, %s71
      %p77 = scmp.eq.s32.totalorder %s16, 0
      %p78 = por %p76, %p77
      %p79 = scmp.ne.s32.totalorder %s68, %s71
      %p80 = scmp.eq.s32.totalorder %s21, 4
      %p81 = por %p79, %p80
      %p82 = scmp.ne.s32.totalorder %s71, %s72
      %p83 = scmp.eq.s32.totalorder %s21, 0
      %p84 = por %p82, %p83
      %p85 = scmp.ne.s32.totalorder %s71, %s72
      %p86 = scmp.eq.s32.totalorder %s22, 4
      %p87 = por %p85, %p86
      %p89 = scmp.ne.s32.totalorder %s72, %s88
      %p90 = scmp.eq.s32.totalorder %s22, 0
      %p91 = por %p89, %p90
      %s92 = ssub.s32 %s16, %s23
      %p93 = scmp.eq.s32.totalorder %s92, 0
      %s95 = sadd.s32 %s94, 1
      %s96 = scalar_select %p93, %s94, %s95
      %p99 = pneg %p93
      %p100 = scmp.eq.s32.totalorder %s16, 4
      %p101 = por %p99, %p100
      %p102 = scmp.ne.s32.totalorder %s94, %s97
      %p103 = scmp.eq.s32.totalorder %s16, 0
      %p104 = por %p102, %p103
      %p105 = scmp.ne.s32.totalorder %s94, %s97
      %p106 = scmp.eq.s32.totalorder %s21, 4
      %p107 = por %p105, %p106
      %p108 = scmp.ne.s32.totalorder %s97, %s98
      %p109 = scmp.eq.s32.totalorder %s21, 0
      %p110 = por %p108, %p109
      %p111 = scmp.ne.s32.totalorder %s97, %s98
      %p112 = scmp.eq.s32.totalorder %s22, 4
      %p113 = por %p111, %p112
      %p115 = scmp.ne.s32.totalorder %s98, %s114
      %p116 = scmp.eq.s32.totalorder %s22, 0
      %p117 = por %p115, %p116
      %p118 = scmp.le.s32.totalorder 1, %s16
      %p119 = scmp.lt.s32.totalorder %s16, 6
      %p120 = pnand %p118, %p119
      %p121 = pneg %p120
      // Predicated region
      $region9: #{tpu_custom_call.1} parent=5 // pred_check
        _
      $region10: #{tpu_custom_call.1} parent=5 // pred_check_branch
        %123 = sbr.rel (%p120) target = $region12
      $region11: #{tpu_custom_call.1} parent=5 // pred_region
        %s124 = ssub.s32 %s16, 1
        // Predicated region
        $region13: #{tpu_custom_call.1} parent=11 // pred_check
          %p125 = pneg %p37
        $region14: #{tpu_custom_call.1} parent=11 // pred_check_branch
          %127 = sbr.rel (%p125) target = $region16
        $region15: #{tpu_custom_call.1} parent=11 // pred_region
          _
        $region16: #{tpu_custom_call.1} parent=11 // pred_fallthru
          _
        // Predicated region
        $region17: #{tpu_custom_call.1} parent=11 // pred_check
          %p128 = pneg %p58
        $region18: #{tpu_custom_call.1} parent=11 // pred_check_branch
          %130 = sbr.rel (%p128) target = $region20
        $region19: #{tpu_custom_call.1} parent=11 // pred_region
          _
        $region20: #{tpu_custom_call.1} parent=11 // pred_fallthru
          _
      $region12: #{tpu_custom_call.1} parent=5 // pred_fallthru
        _
      %p131 = scmp.lt.s32.totalorder %s16, 5
      // Predicated region
      $region21: #{tpu_custom_call.1} parent=5 // pred_check
        %p132 = pneg %p131
      $region22: #{tpu_custom_call.1} parent=5 // pred_check_branch
        %134 = sbr.rel (%p132) target = $region24
      $region23: #{tpu_custom_call.1} parent=5 // pred_region
        // Predicated region
        $region25: #{tpu_custom_call.1} parent=23 // pred_check
          %p135 = pneg %p78
        $region26: #{tpu_custom_call.1} parent=23 // pred_check_branch
          %137 = sbr.rel (%p135) target = $region28
        $region27: #{tpu_custom_call.1} parent=23 // pred_region
          %s138 = sand.u32 %s68, 1
          %s139 = scalar_lea.sflag [#allocation4], %s138
          %s140 = sand.u32 %s68, 1
          %s141 = smul.addr %s140, 250
          %s142 = scalar_lea.vmem [#allocation3], %s141
          %s143 = smul.u32 250, %s16
          %s145 = ssub.s32 4000, 4000
          %146 = vsyncadd %s139, %s145
          %s147 = smul.addr %s143, 16
          %s148 = scalar_lea.hbm %s2, %s147
          %s150 = sshll.u32 %s142, 4
          %s151 = int_to_ptr.vmem [resolvable:$true] %s150
          %153 = dma.hbm_to_vmem [thread:$0]  %s148, 4000, %s151, %s139
        $region28: #{tpu_custom_call.1} parent=23 // pred_fallthru
          _
      $region24: #{tpu_custom_call.1} parent=5 // pred_fallthru
        _
      %p154 = scmp.le.s32.totalorder 1, %s16
      %p155 = scmp.lt.s32.totalorder %s16, 6
      %p156 = pnand %p154, %p155
      %p157 = pneg %p156
      // Predicated region
      $region29: #{tpu_custom_call.1} parent=5 // pred_check
        _
      $region30: #{tpu_custom_call.1} parent=5 // pred_check_branch
        %159 = sbr.rel (%p156) target = $region32
      $region31: #{tpu_custom_call.1} parent=5 // pred_region
        %s160 = ssub.s32 %s16, 1
        %s161 = sand.u32 %s71, 1
        %s162 = scalar_lea.sflag [#allocation4], %s161
        %s163 = sand.u32 %s71, 1
        %s164 = smul.addr %s163, 250
        %s165 = scalar_lea.vmem [#allocation3], %s164
        // Predicated region
        $region33: #{tpu_custom_call.1} parent=31 // pred_check
          %p166 = pneg %p84
        $region34: #{tpu_custom_call.1} parent=31 // pred_check_branch
          %168 = sbr.rel (%p166) target = $region36
        $region35: #{tpu_custom_call.1} parent=31 // pred_region
          %169 = dma.done %s162, 4000
        $region36: #{tpu_custom_call.1} parent=31 // pred_fallthru
          _
        %p170 = pneg %p37
        %p171 = pneg %p34
        %p172 = pneg %p58
        %p173 = pneg %p55
        %s174 = sand.u32 %s71, 1
        %s175 = scalar_lea.sflag [#allocation4], %s174
        %s176 = sand.u32 %s71, 1
        %s177 = smul.addr %s176, 250
        %s178 = scalar_lea.vmem [#allocation3], %s177
        %p179 = pneg %p84
        %p180 = pneg %p81
        %p181 = pneg %p110
        %p182 = pneg %p107
        %s183 = sand.u32 %s97, 1
        %s184 = scalar_lea.sflag [#allocation5], %s183
        %s185 = sand.u32 %s97, 1
        %s186 = smul.addr %s185, 4000
        %s187 = scalar_lea.vmem [#allocation6], %s186
        %s188 = smul.u32 250, %s21
        %s189 = smul.u32 250, %s21
        %s190 = sld [smem:[#allocation2]]
        %s191 = smul.f32 %s190, %s190
        %v192 = vld [vmem:[%s1] sm:$0xff]
        %v193 = vld [vmem:[%s1 + $0x8] sm:$0xff]
        %v194 = vstv %s191
        %v195 = vmul.f32 %v192, %v194
        %v196 = vmul.f32 %v193, %v194
        %v197 = vld [vmem:[%s165] sm:$0xff]
        %v198 = vld [vmem:[%s165 + $0x8] sm:$0xff]
        %v199 = vld [vmem:[%s165 + $0x10] sm:$0xff]
        %v200 = vld [vmem:[%s165 + $0x18] sm:$0xff]
        %v201 = vld [vmem:[%s165 + $0x20] sm:$0xff]
        %v202 = vld [vmem:[%s165 + $0x28] sm:$0xff]
        %v203 = vld [vmem:[%s165 + $0x30] sm:$0xff]
        %v204 = vld [vmem:[%s165 + $0x38] sm:$0xff]
        %v205 = vld [vmem:[%s165 + $0x40] sm:$0xff]
        %v206 = vld [vmem:[%s165 + $0x48] sm:$0xff]
        %v207 = vld [vmem:[%s165 + $0x50] sm:$0xff]
        %v208 = vld [vmem:[%s165 + $0x58] sm:$0xff]
        %v209 = vld [vmem:[%s165 + $0x60] sm:$0xff]
        %v210 = vld [vmem:[%s165 + $0x68] sm:$0xff]
        %v211 = vld [vmem:[%s165 + $0x70] sm:$0xff]
        %v212 = vld [vmem:[%s165 + $0x78] sm:$0xff]
        %v213 = vld [vmem:[%s165 + $0x80] sm:$0xff]
        %v214 = vld [vmem:[%s165 + $0x88] sm:$0xff]
        %v215 = vld [vmem:[%s165 + $0x90] sm:$0xff]
        %v216 = vld [vmem:[%s165 + $0x98] sm:$0xff]
        %v217 = vld [vmem:[%s165 + $0xa0] sm:$0xff]
        %v218 = vld [vmem:[%s165 + $0xa8] sm:$0xff]
        %v219 = vld [vmem:[%s165 + $0xb0] sm:$0xff]
        %v220 = vld [vmem:[%s165 + $0xb8] sm:$0xff]
        %v221 = vld [vmem:[%s165 + $0xc0] sm:$0xff]
        %v222 = vld [vmem:[%s165 + $0xc8] sm:$0xff]
        %v223 = vld [vmem:[%s165 + $0xd0] sm:$0xff]
        %v224 = vld [vmem:[%s165 + $0xd8] sm:$0xff]
        %v225 = vld [vmem:[%s165 + $0xe0] sm:$0xff]
        %v226 = vld [vmem:[%s165 + $0xe8] sm:$0xff]
        %v227 = vld [vmem:[%s165 + $0xf0] sm:$0xff]
        %v228 = vld [vmem:[%s165 + $0xf8] sm:$0x3]
        %230 = vset.pattern.permute.xlu0 0
        %231 = vperm.xlu0 %230, %v195
        %v232 = vpop.permute.xlu0 %231
        %235 = vset.pattern.permute.xlu0 0
        %236 = vperm.xlu0 %235, %v196
        %v237 = vpop.permute.xlu0 %236
        %v271 = vlaneseq
        %v272 = vshrl.u32 %v271, 7
        %v273 = vsub.s32 0, %v272
        %v274 = vrot.slane %v197, %v273
        %v275 = vlaneseq
        %v276 = vshrl.u32 %v275, 7
        %v277 = vsub.s32 1, %v276
        %v278 = vrot.slane %v197, %v277
        %v279 = vlaneseq
        %v280 = vshrl.u32 %v279, 7
        %v281 = vsub.s32 2, %v280
        %v282 = vrot.slane %v197, %v281
        %v283 = vlaneseq
        %v284 = vshrl.u32 %v283, 7
        %v285 = vsub.s32 3, %v284
        %v286 = vrot.slane %v197, %v285
        %v287 = vlaneseq
        %v288 = vshrl.u32 %v287, 7
        %v289 = vsub.s32 4, %v288
        %v290 = vrot.slane %v197, %v289
        %v291 = vlaneseq
        %v292 = vshrl.u32 %v291, 7
        %v293 = vsub.s32 5, %v292
        %v294 = vrot.slane %v197, %v293
        %v295 = vlaneseq
        %v296 = vshrl.u32 %v295, 7
        %v297 = vsub.s32 6, %v296
        %v298 = vrot.slane %v197, %v297
        %v299 = vlaneseq
        %v300 = vshrl.u32 %v299, 7
        %v301 = vsub.s32 7, %v300
        %v302 = vrot.slane %v197, %v301
        %v303 = vlaneseq
        %v304 = vshrl.u32 %v303, 7
        %v305 = vsub.s32 0, %v304
        %v306 = vrot.slane %v198, %v305
        %v307 = vlaneseq
        %v308 = vshrl.u32 %v307, 7
        %v309 = vsub.s32 1, %v308
        %v310 = vrot.slane %v198, %v309
        %v311 = vlaneseq
        %v312 = vshrl.u32 %v311, 7
        %v313 = vsub.s32 2, %v312
        %v314 = vrot.slane %v198, %v313
        %v315 = vlaneseq
        %v316 = vshrl.u32 %v315, 7
        %v317 = vsub.s32 3, %v316
        %v318 = vrot.slane %v198, %v317
        %v319 = vlaneseq
        %v320 = vshrl.u32 %v319, 7
        %v321 = vsub.s32 4, %v320
        %v322 = vrot.slane %v198, %v321
        %v323 = vlaneseq
        %v324 = vshrl.u32 %v323, 7
        %v325 = vsub.s32 5, %v324
        %v326 = vrot.slane %v198, %v325
        %v327 = vlaneseq
        %v328 = vshrl.u32 %v327, 7
        %v329 = vsub.s32 6, %v328
        %v330 = vrot.slane %v198, %v329
        %v331 = vlaneseq
        %v332 = vshrl.u32 %v331, 7
        %v333 = vsub.s32 7, %v332
        %v334 = vrot.slane %v198, %v333
        %v335 = vlaneseq
        %v336 = vshrl.u32 %v335, 7
        %v337 = vsub.s32 0, %v336
        %v338 = vrot.slane %v199, %v337
        %v339 = vlaneseq
        %v340 = vshrl.u32 %v339, 7
        %v341 = vsub.s32 1, %v340
        %v342 = vrot.slane %v199, %v341
        %v343 = vlaneseq
        %v344 = vshrl.u32 %v343, 7
        %v345 = vsub.s32 2, %v344
        %v346 = vrot.slane %v199, %v345
        %v347 = vlaneseq
        %v348 = vshrl.u32 %v347, 7
        %v349 = vsub.s32 3, %v348
        %v350 = vrot.slane %v199, %v349
        %v351 = vlaneseq
        %v352 = vshrl.u32 %v351, 7
        %v353 = vsub.s32 4, %v352
        %v354 = vrot.slane %v199, %v353
        %v355 = vlaneseq
        %v356 = vshrl.u32 %v355, 7
        %v357 = vsub.s32 5, %v356
        %v358 = vrot.slane %v199, %v357
        %v359 = vlaneseq
        %v360 = vshrl.u32 %v359, 7
        %v361 = vsub.s32 6, %v360
        %v362 = vrot.slane %v199, %v361
        %v363 = vlaneseq
        %v364 = vshrl.u32 %v363, 7
        %v365 = vsub.s32 7, %v364
        %v366 = vrot.slane %v199, %v365
        %v367 = vlaneseq
        %v368 = vshrl.u32 %v367, 7
        %v369 = vsub.s32 0, %v368
        %v370 = vrot.slane %v200, %v369
        %v371 = vlaneseq
        %v372 = vshrl.u32 %v371, 7
        %v373 = vsub.s32 1, %v372
        %v374 = vrot.slane %v200, %v373
        %v375 = vlaneseq
        %v376 = vshrl.u32 %v375, 7
        %v377 = vsub.s32 2, %v376
        %v378 = vrot.slane %v200, %v377
        %v379 = vlaneseq
        %v380 = vshrl.u32 %v379, 7
        %v381 = vsub.s32 3, %v380
        %v382 = vrot.slane %v200, %v381
        %v383 = vlaneseq
        %v384 = vshrl.u32 %v383, 7
        %v385 = vsub.s32 4, %v384
        %v386 = vrot.slane %v200, %v385
        %v387 = vlaneseq
        %v388 = vshrl.u32 %v387, 7
        %v389 = vsub.s32 5, %v388
        %v390 = vrot.slane %v200, %v389
        %v391 = vlaneseq
        %v392 = vshrl.u32 %v391, 7
        %v393 = vsub.s32 6, %v392
        %v394 = vrot.slane %v200, %v393
        %v395 = vlaneseq
        %v396 = vshrl.u32 %v395, 7
        %v397 = vsub.s32 7, %v396
        %v398 = vrot.slane %v200, %v397
        %v399 = vlaneseq
        %v400 = vshrl.u32 %v399, 7
        %v401 = vsub.s32 0, %v400
        %v402 = vrot.slane %v201, %v401
        %v403 = vlaneseq
        %v404 = vshrl.u32 %v403, 7
        %v405 = vsub.s32 1, %v404
        %v406 = vrot.slane %v201, %v405
        %v407 = vlaneseq
        %v408 = vshrl.u32 %v407, 7
        %v409 = vsub.s32 2, %v408
        %v410 = vrot.slane %v201, %v409
        %v411 = vlaneseq
        %v412 = vshrl.u32 %v411, 7
        %v413 = vsub.s32 3, %v412
        %v414 = vrot.slane %v201, %v413
        %v415 = vlaneseq
        %v416 = vshrl.u32 %v415, 7
        %v417 = vsub.s32 4, %v416
        %v418 = vrot.slane %v201, %v417
        %v419 = vlaneseq
        %v420 = vshrl.u32 %v419, 7
        %v421 = vsub.s32 5, %v420
        %v422 = vrot.slane %v201, %v421
        %v423 = vlaneseq
        %v424 = vshrl.u32 %v423, 7
        %v425 = vsub.s32 6, %v424
        %v426 = vrot.slane %v201, %v425
        %v427 = vlaneseq
        %v428 = vshrl.u32 %v427, 7
        %v429 = vsub.s32 7, %v428
        %v430 = vrot.slane %v201, %v429
        %v431 = vlaneseq
        %v432 = vshrl.u32 %v431, 7
        %v433 = vsub.s32 0, %v432
        %v434 = vrot.slane %v202, %v433
        %v435 = vlaneseq
        %v436 = vshrl.u32 %v435, 7
        %v437 = vsub.s32 1, %v436
        %v438 = vrot.slane %v202, %v437
        %v439 = vlaneseq
        %v440 = vshrl.u32 %v439, 7
        %v441 = vsub.s32 2, %v440
        %v442 = vrot.slane %v202, %v441
        %v443 = vlaneseq
        %v444 = vshrl.u32 %v443, 7
        %v445 = vsub.s32 3, %v444
        %v446 = vrot.slane %v202, %v445
        %v447 = vlaneseq
        %v448 = vshrl.u32 %v447, 7
        %v449 = vsub.s32 4, %v448
        %v450 = vrot.slane %v202, %v449
        %v451 = vlaneseq
        %v452 = vshrl.u32 %v451, 7
        %v453 = vsub.s32 5, %v452
        %v454 = vrot.slane %v202, %v453
        %v455 = vlaneseq
        %v456 = vshrl.u32 %v455, 7
        %v457 = vsub.s32 6, %v456
        %v458 = vrot.slane %v202, %v457
        %v459 = vlaneseq
        %v460 = vshrl.u32 %v459, 7
        %v461 = vsub.s32 7, %v460
        %v462 = vrot.slane %v202, %v461
        %v463 = vlaneseq
        %v464 = vshrl.u32 %v463, 7
        %v465 = vsub.s32 0, %v464
        %v466 = vrot.slane %v203, %v465
        %v467 = vlaneseq
        %v468 = vshrl.u32 %v467, 7
        %v469 = vsub.s32 1, %v468
        %v470 = vrot.slane %v203, %v469
        %v471 = vlaneseq
        %v472 = vshrl.u32 %v471, 7
        %v473 = vsub.s32 2, %v472
        %v474 = vrot.slane %v203, %v473
        %v475 = vlaneseq
        %v476 = vshrl.u32 %v475, 7
        %v477 = vsub.s32 3, %v476
        %v478 = vrot.slane %v203, %v477
        %v479 = vlaneseq
        %v480 = vshrl.u32 %v479, 7
        %v481 = vsub.s32 4, %v480
        %v482 = vrot.slane %v203, %v481
        %v483 = vlaneseq
        %v484 = vshrl.u32 %v483, 7
        %v485 = vsub.s32 5, %v484
        %v486 = vrot.slane %v203, %v485
        %v487 = vlaneseq
        %v488 = vshrl.u32 %v487, 7
        %v489 = vsub.s32 6, %v488
        %v490 = vrot.slane %v203, %v489
        %v491 = vlaneseq
        %v492 = vshrl.u32 %v491, 7
        %v493 = vsub.s32 7, %v492
        %v494 = vrot.slane %v203, %v493
        %v495 = vlaneseq
        %v496 = vshrl.u32 %v495, 7
        %v497 = vsub.s32 0, %v496
        %v498 = vrot.slane %v204, %v497
        %v499 = vlaneseq
        %v500 = vshrl.u32 %v499, 7
        %v501 = vsub.s32 1, %v500
        %v502 = vrot.slane %v204, %v501
        %v503 = vlaneseq
        %v504 = vshrl.u32 %v503, 7
        %v505 = vsub.s32 2, %v504
        %v506 = vrot.slane %v204, %v505
        %v507 = vlaneseq
        %v508 = vshrl.u32 %v507, 7
        %v509 = vsub.s32 3, %v508
        %v510 = vrot.slane %v204, %v509
        %v511 = vlaneseq
        %v512 = vshrl.u32 %v511, 7
        %v513 = vsub.s32 4, %v512
        %v514 = vrot.slane %v204, %v513
        %v515 = vlaneseq
        %v516 = vshrl.u32 %v515, 7
        %v517 = vsub.s32 5, %v516
        %v518 = vrot.slane %v204, %v517
        %v519 = vlaneseq
        %v520 = vshrl.u32 %v519, 7
        %v521 = vsub.s32 6, %v520
        %v522 = vrot.slane %v204, %v521
        %v523 = vlaneseq
        %v524 = vshrl.u32 %v523, 7
        %v525 = vsub.s32 7, %v524
        %v526 = vrot.slane %v204, %v525
        %v527 = vlaneseq
        %v528 = vshrl.u32 %v527, 7
        %v529 = vsub.s32 0, %v528
        %v530 = vrot.slane %v205, %v529
        %v531 = vlaneseq
        %v532 = vshrl.u32 %v531, 7
        %v533 = vsub.s32 1, %v532
        %v534 = vrot.slane %v205, %v533
        %v535 = vlaneseq
        %v536 = vshrl.u32 %v535, 7
        %v537 = vsub.s32 2, %v536
        %v538 = vrot.slane %v205, %v537
        %v539 = vlaneseq
        %v540 = vshrl.u32 %v539, 7
        %v541 = vsub.s32 3, %v540
        %v542 = vrot.slane %v205, %v541
        %v543 = vlaneseq
        %v544 = vshrl.u32 %v543, 7
        %v545 = vsub.s32 4, %v544
        %v546 = vrot.slane %v205, %v545
        %v547 = vlaneseq
        %v548 = vshrl.u32 %v547, 7
        %v549 = vsub.s32 5, %v548
        %v550 = vrot.slane %v205, %v549
        %v551 = vlaneseq
        %v552 = vshrl.u32 %v551, 7
        %v553 = vsub.s32 6, %v552
        %v554 = vrot.slane %v205, %v553
        %v555 = vlaneseq
        %v556 = vshrl.u32 %v555, 7
        %v557 = vsub.s32 7, %v556
        %v558 = vrot.slane %v205, %v557
        %v559 = vlaneseq
        %v560 = vshrl.u32 %v559, 7
        %v561 = vsub.s32 0, %v560
        %v562 = vrot.slane %v206, %v561
        %v563 = vlaneseq
        %v564 = vshrl.u32 %v563, 7
        %v565 = vsub.s32 1, %v564
        %v566 = vrot.slane %v206, %v565
        %v567 = vlaneseq
        %v568 = vshrl.u32 %v567, 7
        %v569 = vsub.s32 2, %v568
        %v570 = vrot.slane %v206, %v569
        %v571 = vlaneseq
        %v572 = vshrl.u32 %v571, 7
        %v573 = vsub.s32 3, %v572
        %v574 = vrot.slane %v206, %v573
        %v575 = vlaneseq
        %v576 = vshrl.u32 %v575, 7
        %v577 = vsub.s32 4, %v576
        %v578 = vrot.slane %v206, %v577
        %v579 = vlaneseq
        %v580 = vshrl.u32 %v579, 7
        %v581 = vsub.s32 5, %v580
        %v582 = vrot.slane %v206, %v581
        %v583 = vlaneseq
        %v584 = vshrl.u32 %v583, 7
        %v585 = vsub.s32 6, %v584
        %v586 = vrot.slane %v206, %v585
        %v587 = vlaneseq
        %v588 = vshrl.u32 %v587, 7
        %v589 = vsub.s32 7, %v588
        %v590 = vrot.slane %v206, %v589
        %v591 = vlaneseq
        %v592 = vshrl.u32 %v591, 7
        %v593 = vsub.s32 0, %v592
        %v594 = vrot.slane %v207, %v593
        %v595 = vlaneseq
        %v596 = vshrl.u32 %v595, 7
        %v597 = vsub.s32 1, %v596
        %v598 = vrot.slane %v207, %v597
        %v599 = vlaneseq
        %v600 = vshrl.u32 %v599, 7
        %v601 = vsub.s32 2, %v600
        %v602 = vrot.slane %v207, %v601
        %v603 = vlaneseq
        %v604 = vshrl.u32 %v603, 7
        %v605 = vsub.s32 3, %v604
        %v606 = vrot.slane %v207, %v605
        %v607 = vlaneseq
        %v608 = vshrl.u32 %v607, 7
        %v609 = vsub.s32 4, %v608
        %v610 = vrot.slane %v207, %v609
        %v611 = vlaneseq
        %v612 = vshrl.u32 %v611, 7
        %v613 = vsub.s32 5, %v612
        %v614 = vrot.slane %v207, %v613
        %v615 = vlaneseq
        %v616 = vshrl.u32 %v615, 7
        %v617 = vsub.s32 6, %v616
        %v618 = vrot.slane %v207, %v617
        %v619 = vlaneseq
        %v620 = vshrl.u32 %v619, 7
        %v621 = vsub.s32 7, %v620
        %v622 = vrot.slane %v207, %v621
        %v623 = vlaneseq
        %v624 = vshrl.u32 %v623, 7
        %v625 = vsub.s32 0, %v624
        %v626 = vrot.slane %v208, %v625
        %v627 = vlaneseq
        %v628 = vshrl.u32 %v627, 7
        %v629 = vsub.s32 1, %v628
        %v630 = vrot.slane %v208, %v629
        %v631 = vlaneseq
        %v632 = vshrl.u32 %v631, 7
        %v633 = vsub.s32 2, %v632
        %v634 = vrot.slane %v208, %v633
        %v635 = vlaneseq
        %v636 = vshrl.u32 %v635, 7
        %v637 = vsub.s32 3, %v636
        %v638 = vrot.slane %v208, %v637
        %v639 = vlaneseq
        %v640 = vshrl.u32 %v639, 7
        %v641 = vsub.s32 4, %v640
        %v642 = vrot.slane %v208, %v641
        %v643 = vlaneseq
        %v644 = vshrl.u32 %v643, 7
        %v645 = vsub.s32 5, %v644
        %v646 = vrot.slane %v208, %v645
        %v647 = vlaneseq
        %v648 = vshrl.u32 %v647, 7
        %v649 = vsub.s32 6, %v648
        %v650 = vrot.slane %v208, %v649
        %v651 = vlaneseq
        %v652 = vshrl.u32 %v651, 7
        %v653 = vsub.s32 7, %v652
        %v654 = vrot.slane %v208, %v653
        %v655 = vlaneseq
        %v656 = vshrl.u32 %v655, 7
        %v657 = vsub.s32 0, %v656
        %v658 = vrot.slane %v209, %v657
        %v659 = vlaneseq
        %v660 = vshrl.u32 %v659, 7
        %v661 = vsub.s32 1, %v660
        %v662 = vrot.slane %v209, %v661
        %v663 = vlaneseq
        %v664 = vshrl.u32 %v663, 7
        %v665 = vsub.s32 2, %v664
        %v666 = vrot.slane %v209, %v665
        %v667 = vlaneseq
        %v668 = vshrl.u32 %v667, 7
        %v669 = vsub.s32 3, %v668
        %v670 = vrot.slane %v209, %v669
        %v671 = vlaneseq
        %v672 = vshrl.u32 %v671, 7
        %v673 = vsub.s32 4, %v672
        %v674 = vrot.slane %v209, %v673
        %v675 = vlaneseq
        %v676 = vshrl.u32 %v675, 7
        %v677 = vsub.s32 5, %v676
        %v678 = vrot.slane %v209, %v677
        %v679 = vlaneseq
        %v680 = vshrl.u32 %v679, 7
        %v681 = vsub.s32 6, %v680
        %v682 = vrot.slane %v209, %v681
        %v683 = vlaneseq
        %v684 = vshrl.u32 %v683, 7
        %v685 = vsub.s32 7, %v684
        %v686 = vrot.slane %v209, %v685
        %v687 = vlaneseq
        %v688 = vshrl.u32 %v687, 7
        %v689 = vsub.s32 0, %v688
        %v690 = vrot.slane %v210, %v689
        %v691 = vlaneseq
        %v692 = vshrl.u32 %v691, 7
        %v693 = vsub.s32 1, %v692
        %v694 = vrot.slane %v210, %v693
        %v695 = vlaneseq
        %v696 = vshrl.u32 %v695, 7
        %v697 = vsub.s32 2, %v696
        %v698 = vrot.slane %v210, %v697
        %v699 = vlaneseq
        %v700 = vshrl.u32 %v699, 7
        %v701 = vsub.s32 3, %v700
        %v702 = vrot.slane %v210, %v701
        %v703 = vlaneseq
        %v704 = vshrl.u32 %v703, 7
        %v705 = vsub.s32 4, %v704
        %v706 = vrot.slane %v210, %v705
        %v707 = vlaneseq
        %v708 = vshrl.u32 %v707, 7
        %v709 = vsub.s32 5, %v708
        %v710 = vrot.slane %v210, %v709
        %v711 = vlaneseq
        %v712 = vshrl.u32 %v711, 7
        %v713 = vsub.s32 6, %v712
        %v714 = vrot.slane %v210, %v713
        %v715 = vlaneseq
        %v716 = vshrl.u32 %v715, 7
        %v717 = vsub.s32 7, %v716
        %v718 = vrot.slane %v210, %v717
        %v719 = vlaneseq
        %v720 = vshrl.u32 %v719, 7
        %v721 = vsub.s32 0, %v720
        %v722 = vrot.slane %v211, %v721
        %v723 = vlaneseq
        %v724 = vshrl.u32 %v723, 7
        %v725 = vsub.s32 1, %v724
        %v726 = vrot.slane %v211, %v725
        %v727 = vlaneseq
        %v728 = vshrl.u32 %v727, 7
        %v729 = vsub.s32 2, %v728
        %v730 = vrot.slane %v211, %v729
        %v731 = vlaneseq
        %v732 = vshrl.u32 %v731, 7
        %v733 = vsub.s32 3, %v732
        %v734 = vrot.slane %v211, %v733
        %v735 = vlaneseq
        %v736 = vshrl.u32 %v735, 7
        %v737 = vsub.s32 4, %v736
        %v738 = vrot.slane %v211, %v737
        %v739 = vlaneseq
        %v740 = vshrl.u32 %v739, 7
        %v741 = vsub.s32 5, %v740
        %v742 = vrot.slane %v211, %v741
        %v743 = vlaneseq
        %v744 = vshrl.u32 %v743, 7
        %v745 = vsub.s32 6, %v744
        %v746 = vrot.slane %v211, %v745
        %v747 = vlaneseq
        %v748 = vshrl.u32 %v747, 7
        %v749 = vsub.s32 7, %v748
        %v750 = vrot.slane %v211, %v749
        %v751 = vlaneseq
        %v752 = vshrl.u32 %v751, 7
        %v753 = vsub.s32 0, %v752
        %v754 = vrot.slane %v212, %v753
        %v755 = vlaneseq
        %v756 = vshrl.u32 %v755, 7
        %v757 = vsub.s32 1, %v756
        %v758 = vrot.slane %v212, %v757
        %v759 = vlaneseq
        %v760 = vshrl.u32 %v759, 7
        %v761 = vsub.s32 2, %v760
        %v762 = vrot.slane %v212, %v761
        %v763 = vlaneseq
        %v764 = vshrl.u32 %v763, 7
        %v765 = vsub.s32 3, %v764
        %v766 = vrot.slane %v212, %v765
        %v767 = vlaneseq
        %v768 = vshrl.u32 %v767, 7
        %v769 = vsub.s32 4, %v768
        %v770 = vrot.slane %v212, %v769
        %v771 = vlaneseq
        %v772 = vshrl.u32 %v771, 7
        %v773 = vsub.s32 5, %v772
        %v774 = vrot.slane %v212, %v773
        %v775 = vlaneseq
        %v776 = vshrl.u32 %v775, 7
        %v777 = vsub.s32 6, %v776
        %v778 = vrot.slane %v212, %v777
        %v779 = vlaneseq
        %v780 = vshrl.u32 %v779, 7
        %v781 = vsub.s32 7, %v780
        %v782 = vrot.slane %v212, %v781
        %v783 = vlaneseq
        %v784 = vshrl.u32 %v783, 7
        %v785 = vsub.s32 0, %v784
        %v786 = vrot.slane %v213, %v785
        %v787 = vlaneseq
        %v788 = vshrl.u32 %v787, 7
        %v789 = vsub.s32 1, %v788
        %v790 = vrot.slane %v213, %v789
        %v791 = vlaneseq
        %v792 = vshrl.u32 %v791, 7
        %v793 = vsub.s32 2, %v792
        %v794 = vrot.slane %v213, %v793
        %v795 = vlaneseq
        %v796 = vshrl.u32 %v795, 7
        %v797 = vsub.s32 3, %v796
        %v798 = vrot.slane %v213, %v797
        %v799 = vlaneseq
        %v800 = vshrl.u32 %v799, 7
        %v801 = vsub.s32 4, %v800
        %v802 = vrot.slane %v213, %v801
        %v803 = vlaneseq
        %v804 = vshrl.u32 %v803, 7
        %v805 = vsub.s32 5, %v804
        %v806 = vrot.slane %v213, %v805
        %v807 = vlaneseq
        %v808 = vshrl.u32 %v807, 7
        %v809 = vsub.s32 6, %v808
        %v810 = vrot.slane %v213, %v809
        %v811 = vlaneseq
        %v812 = vshrl.u32 %v811, 7
        %v813 = vsub.s32 7, %v812
        %v814 = vrot.slane %v213, %v813
        %v815 = vlaneseq
        %v816 = vshrl.u32 %v815, 7
        %v817 = vsub.s32 0, %v816
        %v818 = vrot.slane %v214, %v817
        %v819 = vlaneseq
        %v820 = vshrl.u32 %v819, 7
        %v821 = vsub.s32 1, %v820
        %v822 = vrot.slane %v214, %v821
        %v823 = vlaneseq
        %v824 = vshrl.u32 %v823, 7
        %v825 = vsub.s32 2, %v824
        %v826 = vrot.slane %v214, %v825
        %v827 = vlaneseq
        %v828 = vshrl.u32 %v827, 7
        %v829 = vsub.s32 3, %v828
        %v830 = vrot.slane %v214, %v829
        %v831 = vlaneseq
        %v832 = vshrl.u32 %v831, 7
        %v833 = vsub.s32 4, %v832
        %v834 = vrot.slane %v214, %v833
        %v835 = vlaneseq
        %v836 = vshrl.u32 %v835, 7
        %v837 = vsub.s32 5, %v836
        %v838 = vrot.slane %v214, %v837
        %v839 = vlaneseq
        %v840 = vshrl.u32 %v839, 7
        %v841 = vsub.s32 6, %v840
        %v842 = vrot.slane %v214, %v841
        %v843 = vlaneseq
        %v844 = vshrl.u32 %v843, 7
        %v845 = vsub.s32 7, %v844
        %v846 = vrot.slane %v214, %v845
        %v847 = vlaneseq
        %v848 = vshrl.u32 %v847, 7
        %v849 = vsub.s32 0, %v848
        %v850 = vrot.slane %v215, %v849
        %v851 = vlaneseq
        %v852 = vshrl.u32 %v851, 7
        %v853 = vsub.s32 1, %v852
        %v854 = vrot.slane %v215, %v853
        %v855 = vlaneseq
        %v856 = vshrl.u32 %v855, 7
        %v857 = vsub.s32 2, %v856
        %v858 = vrot.slane %v215, %v857
        %v859 = vlaneseq
        %v860 = vshrl.u32 %v859, 7
        %v861 = vsub.s32 3, %v860
        %v862 = vrot.slane %v215, %v861
        %v863 = vlaneseq
        %v864 = vshrl.u32 %v863, 7
        %v865 = vsub.s32 4, %v864
        %v866 = vrot.slane %v215, %v865
        %v867 = vlaneseq
        %v868 = vshrl.u32 %v867, 7
        %v869 = vsub.s32 5, %v868
        %v870 = vrot.slane %v215, %v869
        %v871 = vlaneseq
        %v872 = vshrl.u32 %v871, 7
        %v873 = vsub.s32 6, %v872
        %v874 = vrot.slane %v215, %v873
        %v875 = vlaneseq
        %v876 = vshrl.u32 %v875, 7
        %v877 = vsub.s32 7, %v876
        %v878 = vrot.slane %v215, %v877
        %v879 = vlaneseq
        %v880 = vshrl.u32 %v879, 7
        %v881 = vsub.s32 0, %v880
        %v882 = vrot.slane %v216, %v881
        %v883 = vlaneseq
        %v884 = vshrl.u32 %v883, 7
        %v885 = vsub.s32 1, %v884
        %v886 = vrot.slane %v216, %v885
        %v887 = vlaneseq
        %v888 = vshrl.u32 %v887, 7
        %v889 = vsub.s32 2, %v888
        %v890 = vrot.slane %v216, %v889
        %v891 = vlaneseq
        %v892 = vshrl.u32 %v891, 7
        %v893 = vsub.s32 3, %v892
        %v894 = vrot.slane %v216, %v893
        %v895 = vlaneseq
        %v896 = vshrl.u32 %v895, 7
        %v897 = vsub.s32 4, %v896
        %v898 = vrot.slane %v216, %v897
        %v899 = vlaneseq
        %v900 = vshrl.u32 %v899, 7
        %v901 = vsub.s32 5, %v900
        %v902 = vrot.slane %v216, %v901
        %v903 = vlaneseq
        %v904 = vshrl.u32 %v903, 7
        %v905 = vsub.s32 6, %v904
        %v906 = vrot.slane %v216, %v905
        %v907 = vlaneseq
        %v908 = vshrl.u32 %v907, 7
        %v909 = vsub.s32 7, %v908
        %v910 = vrot.slane %v216, %v909
        %v911 = vlaneseq
        %v912 = vshrl.u32 %v911, 7
        %v913 = vsub.s32 0, %v912
        %v914 = vrot.slane %v217, %v913
        %v915 = vlaneseq
        %v916 = vshrl.u32 %v915, 7
        %v917 = vsub.s32 1, %v916
        %v918 = vrot.slane %v217, %v917
        %v919 = vlaneseq
        %v920 = vshrl.u32 %v919, 7
        %v921 = vsub.s32 2, %v920
        %v922 = vrot.slane %v217, %v921
        %v923 = vlaneseq
        %v924 = vshrl.u32 %v923, 7
        %v925 = vsub.s32 3, %v924
        %v926 = vrot.slane %v217, %v925
        %v927 = vlaneseq
        %v928 = vshrl.u32 %v927, 7
        %v929 = vsub.s32 4, %v928
        %v930 = vrot.slane %v217, %v929
        %v931 = vlaneseq
        %v932 = vshrl.u32 %v931, 7
        %v933 = vsub.s32 5, %v932
        %v934 = vrot.slane %v217, %v933
        %v935 = vlaneseq
        %v936 = vshrl.u32 %v935, 7
        %v937 = vsub.s32 6, %v936
        %v938 = vrot.slane %v217, %v937
        %v939 = vlaneseq
        %v940 = vshrl.u32 %v939, 7
        %v941 = vsub.s32 7, %v940
        %v942 = vrot.slane %v217, %v941
        %v943 = vlaneseq
        %v944 = vshrl.u32 %v943, 7
        %v945 = vsub.s32 0, %v944
        %v946 = vrot.slane %v218, %v945
        %v947 = vlaneseq
        %v948 = vshrl.u32 %v947, 7
        %v949 = vsub.s32 1, %v948
        %v950 = vrot.slane %v218, %v949
        %v951 = vlaneseq
        %v952 = vshrl.u32 %v951, 7
        %v953 = vsub.s32 2, %v952
        %v954 = vrot.slane %v218, %v953
        %v955 = vlaneseq
        %v956 = vshrl.u32 %v955, 7
        %v957 = vsub.s32 3, %v956
        %v958 = vrot.slane %v218, %v957
        %v959 = vlaneseq
        %v960 = vshrl.u32 %v959, 7
        %v961 = vsub.s32 4, %v960
        %v962 = vrot.slane %v218, %v961
        %v963 = vlaneseq
        %v964 = vshrl.u32 %v963, 7
        %v965 = vsub.s32 5, %v964
        %v966 = vrot.slane %v218, %v965
        %v967 = vlaneseq
        %v968 = vshrl.u32 %v967, 7
        %v969 = vsub.s32 6, %v968
        %v970 = vrot.slane %v218, %v969
        %v971 = vlaneseq
        %v972 = vshrl.u32 %v971, 7
        %v973 = vsub.s32 7, %v972
        %v974 = vrot.slane %v218, %v973
        %v975 = vlaneseq
        %v976 = vshrl.u32 %v975, 7
        %v977 = vsub.s32 0, %v976
        %v978 = vrot.slane %v219, %v977
        %v979 = vlaneseq
        %v980 = vshrl.u32 %v979, 7
        %v981 = vsub.s32 1, %v980
        %v982 = vrot.slane %v219, %v981
        %v983 = vlaneseq
        %v984 = vshrl.u32 %v983, 7
        %v985 = vsub.s32 2, %v984
        %v986 = vrot.slane %v219, %v985
        %v987 = vlaneseq
        %v988 = vshrl.u32 %v987, 7
        %v989 = vsub.s32 3, %v988
        %v990 = vrot.slane %v219, %v989
        %v991 = vlaneseq
        %v992 = vshrl.u32 %v991, 7
        %v993 = vsub.s32 4, %v992
        %v994 = vrot.slane %v219, %v993
        %v995 = vlaneseq
        %v996 = vshrl.u32 %v995, 7
        %v997 = vsub.s32 5, %v996
        %v998 = vrot.slane %v219, %v997
        %v999 = vlaneseq
        %v1000 = vshrl.u32 %v999, 7
        %v1001 = vsub.s32 6, %v1000
        %v1002 = vrot.slane %v219, %v1001
        %v1003 = vlaneseq
        %v1004 = vshrl.u32 %v1003, 7
        %v1005 = vsub.s32 7, %v1004
        %v1006 = vrot.slane %v219, %v1005
        %v1007 = vlaneseq
        %v1008 = vshrl.u32 %v1007, 7
        %v1009 = vsub.s32 0, %v1008
        %v1010 = vrot.slane %v220, %v1009
        %v1011 = vlaneseq
        %v1012 = vshrl.u32 %v1011, 7
        %v1013 = vsub.s32 1, %v1012
        %v1014 = vrot.slane %v220, %v1013
        %v1015 = vlaneseq
        %v1016 = vshrl.u32 %v1015, 7
        %v1017 = vsub.s32 2, %v1016
        %v1018 = vrot.slane %v220, %v1017
        %v1019 = vlaneseq
        %v1020 = vshrl.u32 %v1019, 7
        %v1021 = vsub.s32 3, %v1020
        %v1022 = vrot.slane %v220, %v1021
        %v1023 = vlaneseq
        %v1024 = vshrl.u32 %v1023, 7
        %v1025 = vsub.s32 4, %v1024
        %v1026 = vrot.slane %v220, %v1025
        %v1027 = vlaneseq
        %v1028 = vshrl.u32 %v1027, 7
        %v1029 = vsub.s32 5, %v1028
        %v1030 = vrot.slane %v220, %v1029
        %v1031 = vlaneseq
        %v1032 = vshrl.u32 %v1031, 7
        %v1033 = vsub.s32 6, %v1032
        %v1034 = vrot.slane %v220, %v1033
        %v1035 = vlaneseq
        %v1036 = vshrl.u32 %v1035, 7
        %v1037 = vsub.s32 7, %v1036
        %v1038 = vrot.slane %v220, %v1037
        %v1039 = vlaneseq
        %v1040 = vshrl.u32 %v1039, 7
        %v1041 = vsub.s32 0, %v1040
        %v1042 = vrot.slane %v221, %v1041
        %v1043 = vlaneseq
        %v1044 = vshrl.u32 %v1043, 7
        %v1045 = vsub.s32 1, %v1044
        %v1046 = vrot.slane %v221, %v1045
        %v1047 = vlaneseq
        %v1048 = vshrl.u32 %v1047, 7
        %v1049 = vsub.s32 2, %v1048
        %v1050 = vrot.slane %v221, %v1049
        %v1051 = vlaneseq
        %v1052 = vshrl.u32 %v1051, 7
        %v1053 = vsub.s32 3, %v1052
        %v1054 = vrot.slane %v221, %v1053
        %v1055 = vlaneseq
        %v1056 = vshrl.u32 %v1055, 7
        %v1057 = vsub.s32 4, %v1056
        %v1058 = vrot.slane %v221, %v1057
        %v1059 = vlaneseq
        %v1060 = vshrl.u32 %v1059, 7
        %v1061 = vsub.s32 5, %v1060
        %v1062 = vrot.slane %v221, %v1061
        %v1063 = vlaneseq
        %v1064 = vshrl.u32 %v1063, 7
        %v1065 = vsub.s32 6, %v1064
        %v1066 = vrot.slane %v221, %v1065
        %v1067 = vlaneseq
        %v1068 = vshrl.u32 %v1067, 7
        %v1069 = vsub.s32 7, %v1068
        %v1070 = vrot.slane %v221, %v1069
        %v1071 = vlaneseq
        %v1072 = vshrl.u32 %v1071, 7
        %v1073 = vsub.s32 0, %v1072
        %v1074 = vrot.slane %v222, %v1073
        %v1075 = vlaneseq
        %v1076 = vshrl.u32 %v1075, 7
        %v1077 = vsub.s32 1, %v1076
        %v1078 = vrot.slane %v222, %v1077
        %v1079 = vlaneseq
        %v1080 = vshrl.u32 %v1079, 7
        %v1081 = vsub.s32 2, %v1080
        %v1082 = vrot.slane %v222, %v1081
        %v1083 = vlaneseq
        %v1084 = vshrl.u32 %v1083, 7
        %v1085 = vsub.s32 3, %v1084
        %v1086 = vrot.slane %v222, %v1085
        %v1087 = vlaneseq
        %v1088 = vshrl.u32 %v1087, 7
        %v1089 = vsub.s32 4, %v1088
        %v1090 = vrot.slane %v222, %v1089
        %v1091 = vlaneseq
        %v1092 = vshrl.u32 %v1091, 7
        %v1093 = vsub.s32 5, %v1092
        %v1094 = vrot.slane %v222, %v1093
        %v1095 = vlaneseq
        %v1096 = vshrl.u32 %v1095, 7
        %v1097 = vsub.s32 6, %v1096
        %v1098 = vrot.slane %v222, %v1097
        %v1099 = vlaneseq
        %v1100 = vshrl.u32 %v1099, 7
        %v1101 = vsub.s32 7, %v1100
        %v1102 = vrot.slane %v222, %v1101
        %v1103 = vlaneseq
        %v1104 = vshrl.u32 %v1103, 7
        %v1105 = vsub.s32 0, %v1104
        %v1106 = vrot.slane %v223, %v1105
        %v1107 = vlaneseq
        %v1108 = vshrl.u32 %v1107, 7
        %v1109 = vsub.s32 1, %v1108
        %v1110 = vrot.slane %v223, %v1109
        %v1111 = vlaneseq
        %v1112 = vshrl.u32 %v1111, 7
        %v1113 = vsub.s32 2, %v1112
        %v1114 = vrot.slane %v223, %v1113
        %v1115 = vlaneseq
        %v1116 = vshrl.u32 %v1115, 7
        %v1117 = vsub.s32 3, %v1116
        %v1118 = vrot.slane %v223, %v1117
        %v1119 = vlaneseq
        %v1120 = vshrl.u32 %v1119, 7
        %v1121 = vsub.s32 4, %v1120
        %v1122 = vrot.slane %v223, %v1121
        %v1123 = vlaneseq
        %v1124 = vshrl.u32 %v1123, 7
        %v1125 = vsub.s32 5, %v1124
        %v1126 = vrot.slane %v223, %v1125
        %v1127 = vlaneseq
        %v1128 = vshrl.u32 %v1127, 7
        %v1129 = vsub.s32 6, %v1128
        %v1130 = vrot.slane %v223, %v1129
        %v1131 = vlaneseq
        %v1132 = vshrl.u32 %v1131, 7
        %v1133 = vsub.s32 7, %v1132
        %v1134 = vrot.slane %v223, %v1133
        %v1135 = vlaneseq
        %v1136 = vshrl.u32 %v1135, 7
        %v1137 = vsub.s32 0, %v1136
        %v1138 = vrot.slane %v224, %v1137
        %v1139 = vlaneseq
        %v1140 = vshrl.u32 %v1139, 7
        %v1141 = vsub.s32 1, %v1140
        %v1142 = vrot.slane %v224, %v1141
        %v1143 = vlaneseq
        %v1144 = vshrl.u32 %v1143, 7
        %v1145 = vsub.s32 2, %v1144
        %v1146 = vrot.slane %v224, %v1145
        %v1147 = vlaneseq
        %v1148 = vshrl.u32 %v1147, 7
        %v1149 = vsub.s32 3, %v1148
        %v1150 = vrot.slane %v224, %v1149
        %v1151 = vlaneseq
        %v1152 = vshrl.u32 %v1151, 7
        %v1153 = vsub.s32 4, %v1152
        %v1154 = vrot.slane %v224, %v1153
        %v1155 = vlaneseq
        %v1156 = vshrl.u32 %v1155, 7
        %v1157 = vsub.s32 5, %v1156
        %v1158 = vrot.slane %v224, %v1157
        %v1159 = vlaneseq
        %v1160 = vshrl.u32 %v1159, 7
        %v1161 = vsub.s32 6, %v1160
        %v1162 = vrot.slane %v224, %v1161
        %v1163 = vlaneseq
        %v1164 = vshrl.u32 %v1163, 7
        %v1165 = vsub.s32 7, %v1164
        %v1166 = vrot.slane %v224, %v1165
        %v1167 = vlaneseq
        %v1168 = vshrl.u32 %v1167, 7
        %v1169 = vsub.s32 0, %v1168
        %v1170 = vrot.slane %v225, %v1169
        %v1171 = vlaneseq
        %v1172 = vshrl.u32 %v1171, 7
        %v1173 = vsub.s32 1, %v1172
        %v1174 = vrot.slane %v225, %v1173
        %v1175 = vlaneseq
        %v1176 = vshrl.u32 %v1175, 7
        %v1177 = vsub.s32 2, %v1176
        %v1178 = vrot.slane %v225, %v1177
        %v1179 = vlaneseq
        %v1180 = vshrl.u32 %v1179, 7
        %v1181 = vsub.s32 3, %v1180
        %v1182 = vrot.slane %v225, %v1181
        %v1183 = vlaneseq
        %v1184 = vshrl.u32 %v1183, 7
        %v1185 = vsub.s32 4, %v1184
        %v1186 = vrot.slane %v225, %v1185
        %v1187 = vlaneseq
        %v1188 = vshrl.u32 %v1187, 7
        %v1189 = vsub.s32 5, %v1188
        %v1190 = vrot.slane %v225, %v1189
        %v1191 = vlaneseq
        %v1192 = vshrl.u32 %v1191, 7
        %v1193 = vsub.s32 6, %v1192
        %v1194 = vrot.slane %v225, %v1193
        %v1195 = vlaneseq
        %v1196 = vshrl.u32 %v1195, 7
        %v1197 = vsub.s32 7, %v1196
        %v1198 = vrot.slane %v225, %v1197
        %v1199 = vlaneseq
        %v1200 = vshrl.u32 %v1199, 7
        %v1201 = vsub.s32 0, %v1200
        %v1202 = vrot.slane %v226, %v1201
        %v1203 = vlaneseq
        %v1204 = vshrl.u32 %v1203, 7
        %v1205 = vsub.s32 1, %v1204
        %v1206 = vrot.slane %v226, %v1205
        %v1207 = vlaneseq
        %v1208 = vshrl.u32 %v1207, 7
        %v1209 = vsub.s32 2, %v1208
        %v1210 = vrot.slane %v226, %v1209
        %v1211 = vlaneseq
        %v1212 = vshrl.u32 %v1211, 7
        %v1213 = vsub.s32 3, %v1212
        %v1214 = vrot.slane %v226, %v1213
        %v1215 = vlaneseq
        %v1216 = vshrl.u32 %v1215, 7
        %v1217 = vsub.s32 4, %v1216
        %v1218 = vrot.slane %v226, %v1217
        %v1219 = vlaneseq
        %v1220 = vshrl.u32 %v1219, 7
        %v1221 = vsub.s32 5, %v1220
        %v1222 = vrot.slane %v226, %v1221
        %v1223 = vlaneseq
        %v1224 = vshrl.u32 %v1223, 7
        %v1225 = vsub.s32 6, %v1224
        %v1226 = vrot.slane %v226, %v1225
        %v1227 = vlaneseq
        %v1228 = vshrl.u32 %v1227, 7
        %v1229 = vsub.s32 7, %v1228
        %v1230 = vrot.slane %v226, %v1229
        %v1231 = vlaneseq
        %v1232 = vshrl.u32 %v1231, 7
        %v1233 = vsub.s32 0, %v1232
        %v1234 = vrot.slane %v227, %v1233
        %v1235 = vlaneseq
        %v1236 = vshrl.u32 %v1235, 7
        %v1237 = vsub.s32 1, %v1236
        %v1238 = vrot.slane %v227, %v1237
        %v1239 = vlaneseq
        %v1240 = vshrl.u32 %v1239, 7
        %v1241 = vsub.s32 2, %v1240
        %v1242 = vrot.slane %v227, %v1241
        %v1243 = vlaneseq
        %v1244 = vshrl.u32 %v1243, 7
        %v1245 = vsub.s32 3, %v1244
        %v1246 = vrot.slane %v227, %v1245
        %v1247 = vlaneseq
        %v1248 = vshrl.u32 %v1247, 7
        %v1249 = vsub.s32 4, %v1248
        %v1250 = vrot.slane %v227, %v1249
        %v1251 = vlaneseq
        %v1252 = vshrl.u32 %v1251, 7
        %v1253 = vsub.s32 5, %v1252
        %v1254 = vrot.slane %v227, %v1253
        %v1255 = vlaneseq
        %v1256 = vshrl.u32 %v1255, 7
        %v1257 = vsub.s32 6, %v1256
        %v1258 = vrot.slane %v227, %v1257
        %v1259 = vlaneseq
        %v1260 = vshrl.u32 %v1259, 7
        %v1261 = vsub.s32 7, %v1260
        %v1262 = vrot.slane %v227, %v1261
        %v1263 = vlaneseq
        %v1264 = vshrl.u32 %v1263, 7
        %v1265 = vsub.s32 0, %v1264
        %v1266 = vrot.slane %v228, %v1265
        %v1267 = vlaneseq
        %v1268 = vshrl.u32 %v1267, 7
        %v1269 = vsub.s32 1, %v1268
        %v1270 = vrot.slane %v228, %v1269
        %v1521 = vmul.f32 %v232, %v274
        %v1522 = vmul.f32 %v232, %v278
        %v1523 = vmul.f32 %v232, %v282
        %v1524 = vmul.f32 %v232, %v286
        %v1525 = vmul.f32 %v232, %v290
        %v1526 = vmul.f32 %v232, %v294
        %v1527 = vmul.f32 %v232, %v298
        %v1528 = vmul.f32 %v232, %v302
        %v1529 = vmul.f32 %v232, %v306
        %v1530 = vmul.f32 %v232, %v310
        %v1531 = vmul.f32 %v232, %v314
        %v1532 = vmul.f32 %v232, %v318
        %v1533 = vmul.f32 %v232, %v322
        %v1534 = vmul.f32 %v232, %v326
        %v1535 = vmul.f32 %v232, %v330
        %v1536 = vmul.f32 %v232, %v334
        %v1537 = vmul.f32 %v232, %v338
        %v1538 = vmul.f32 %v232, %v342
        %v1539 = vmul.f32 %v232, %v346
        %v1540 = vmul.f32 %v232, %v350
        %v1541 = vmul.f32 %v232, %v354
        %v1542 = vmul.f32 %v232, %v358
        %v1543 = vmul.f32 %v232, %v362
        %v1544 = vmul.f32 %v232, %v366
        %v1545 = vmul.f32 %v232, %v370
        %v1546 = vmul.f32 %v232, %v374
        %v1547 = vmul.f32 %v232, %v378
        %v1548 = vmul.f32 %v232, %v382
        %v1549 = vmul.f32 %v232, %v386
        %v1550 = vmul.f32 %v232, %v390
        %v1551 = vmul.f32 %v232, %v394
        %v1552 = vmul.f32 %v232, %v398
        %v1553 = vmul.f32 %v232, %v402
        %v1554 = vmul.f32 %v232, %v406
        %v1555 = vmul.f32 %v232, %v410
        %v1556 = vmul.f32 %v232, %v414
        %v1557 = vmul.f32 %v232, %v418
        %v1558 = vmul.f32 %v232, %v422
        %v1559 = vmul.f32 %v232, %v426
        %v1560 = vmul.f32 %v232, %v430
        %v1561 = vmul.f32 %v232, %v434
        %v1562 = vmul.f32 %v232, %v438
        %v1563 = vmul.f32 %v232, %v442
        %v1564 = vmul.f32 %v232, %v446
        %v1565 = vmul.f32 %v232, %v450
        %v1566 = vmul.f32 %v232, %v454
        %v1567 = vmul.f32 %v232, %v458
        %v1568 = vmul.f32 %v232, %v462
        %v1569 = vmul.f32 %v232, %v466
        %v1570 = vmul.f32 %v232, %v470
        %v1571 = vmul.f32 %v232, %v474
        %v1572 = vmul.f32 %v232, %v478
        %v1573 = vmul.f32 %v232, %v482
        %v1574 = vmul.f32 %v232, %v486
        %v1575 = vmul.f32 %v232, %v490
        %v1576 = vmul.f32 %v232, %v494
        %v1577 = vmul.f32 %v232, %v498
        %v1578 = vmul.f32 %v232, %v502
        %v1579 = vmul.f32 %v232, %v506
        %v1580 = vmul.f32 %v232, %v510
        %v1581 = vmul.f32 %v232, %v514
        %v1582 = vmul.f32 %v232, %v518
        %v1583 = vmul.f32 %v232, %v522
        %v1584 = vmul.f32 %v232, %v526
        %v1585 = vmul.f32 %v232, %v530
        %v1586 = vmul.f32 %v232, %v534
        %v1587 = vmul.f32 %v232, %v538
        %v1588 = vmul.f32 %v232, %v542
        %v1589 = vmul.f32 %v232, %v546
        %v1590 = vmul.f32 %v232, %v550
        %v1591 = vmul.f32 %v232, %v554
        %v1592 = vmul.f32 %v232, %v558
        %v1593 = vmul.f32 %v232, %v562
        %v1594 = vmul.f32 %v232, %v566
        %v1595 = vmul.f32 %v232, %v570
        %v1596 = vmul.f32 %v232, %v574
        %v1597 = vmul.f32 %v232, %v578
        %v1598 = vmul.f32 %v232, %v582
        %v1599 = vmul.f32 %v232, %v586
        %v1600 = vmul.f32 %v232, %v590
        %v1601 = vmul.f32 %v232, %v594
        %v1602 = vmul.f32 %v232, %v598
        %v1603 = vmul.f32 %v232, %v602
        %v1604 = vmul.f32 %v232, %v606
        %v1605 = vmul.f32 %v232, %v610
        %v1606 = vmul.f32 %v232, %v614
        %v1607 = vmul.f32 %v232, %v618
        %v1608 = vmul.f32 %v232, %v622
        %v1609 = vmul.f32 %v232, %v626
        %v1610 = vmul.f32 %v232, %v630
        %v1611 = vmul.f32 %v232, %v634
        %v1612 = vmul.f32 %v232, %v638
        %v1613 = vmul.f32 %v232, %v642
        %v1614 = vmul.f32 %v232, %v646
        %v1615 = vmul.f32 %v232, %v650
        %v1616 = vmul.f32 %v232, %v654
        %v1617 = vmul.f32 %v232, %v658
        %v1618 = vmul.f32 %v232, %v662
        %v1619 = vmul.f32 %v232, %v666
        %v1620 = vmul.f32 %v232, %v670
        %v1621 = vmul.f32 %v232, %v674
        %v1622 = vmul.f32 %v232, %v678
        %v1623 = vmul.f32 %v232, %v682
        %v1624 = vmul.f32 %v232, %v686
        %v1625 = vmul.f32 %v232, %v690
        %v1626 = vmul.f32 %v232, %v694
        %v1627 = vmul.f32 %v232, %v698
        %v1628 = vmul.f32 %v232, %v702
        %v1629 = vmul.f32 %v232, %v706
        %v1630 = vmul.f32 %v232, %v710
        %v1631 = vmul.f32 %v232, %v714
        %v1632 = vmul.f32 %v232, %v718
        %v1633 = vmul.f32 %v232, %v722
        %v1634 = vmul.f32 %v232, %v726
        %v1635 = vmul.f32 %v232, %v730
        %v1636 = vmul.f32 %v232, %v734
        %v1637 = vmul.f32 %v232, %v738
        %v1638 = vmul.f32 %v232, %v742
        %v1639 = vmul.f32 %v232, %v746
        %v1640 = vmul.f32 %v232, %v750
        %v1641 = vmul.f32 %v232, %v754
        %v1642 = vmul.f32 %v232, %v758
        %v1643 = vmul.f32 %v232, %v762
        %v1644 = vmul.f32 %v232, %v766
        %v1645 = vmul.f32 %v232, %v770
        %v1646 = vmul.f32 %v232, %v774
        %v1647 = vmul.f32 %v232, %v778
        %v1648 = vmul.f32 %v232, %v782
        %v1649 = vmul.f32 %v232, %v786
        %v1650 = vmul.f32 %v232, %v790
        %v1651 = vmul.f32 %v232, %v794
        %v1652 = vmul.f32 %v232, %v798
        %v1653 = vmul.f32 %v232, %v802
        %v1654 = vmul.f32 %v232, %v806
        %v1655 = vmul.f32 %v232, %v810
        %v1656 = vmul.f32 %v232, %v814
        %v1657 = vmul.f32 %v232, %v818
        %v1658 = vmul.f32 %v232, %v822
        %v1659 = vmul.f32 %v232, %v826
        %v1660 = vmul.f32 %v232, %v830
        %v1661 = vmul.f32 %v232, %v834
        %v1662 = vmul.f32 %v232, %v838
        %v1663 = vmul.f32 %v232, %v842
        %v1664 = vmul.f32 %v232, %v846
        %v1665 = vmul.f32 %v232, %v850
        %v1666 = vmul.f32 %v232, %v854
        %v1667 = vmul.f32 %v232, %v858
        %v1668 = vmul.f32 %v232, %v862
        %v1669 = vmul.f32 %v232, %v866
        %v1670 = vmul.f32 %v232, %v870
        %v1671 = vmul.f32 %v232, %v874
        %v1672 = vmul.f32 %v232, %v878
        %v1673 = vmul.f32 %v232, %v882
        %v1674 = vmul.f32 %v232, %v886
        %v1675 = vmul.f32 %v232, %v890
        %v1676 = vmul.f32 %v232, %v894
        %v1677 = vmul.f32 %v232, %v898
        %v1678 = vmul.f32 %v232, %v902
        %v1679 = vmul.f32 %v232, %v906
        %v1680 = vmul.f32 %v232, %v910
        %v1681 = vmul.f32 %v232, %v914
        %v1682 = vmul.f32 %v232, %v918
        %v1683 = vmul.f32 %v232, %v922
        %v1684 = vmul.f32 %v232, %v926
        %v1685 = vmul.f32 %v232, %v930
        %v1686 = vmul.f32 %v232, %v934
        %v1687 = vmul.f32 %v232, %v938
        %v1688 = vmul.f32 %v232, %v942
        %v1689 = vmul.f32 %v232, %v946
        %v1690 = vmul.f32 %v232, %v950
        %v1691 = vmul.f32 %v232, %v954
        %v1692 = vmul.f32 %v232, %v958
        %v1693 = vmul.f32 %v232, %v962
        %v1694 = vmul.f32 %v232, %v966
        %v1695 = vmul.f32 %v232, %v970
        %v1696 = vmul.f32 %v232, %v974
        %v1697 = vmul.f32 %v232, %v978
        %v1698 = vmul.f32 %v232, %v982
        %v1699 = vmul.f32 %v232, %v986
        %v1700 = vmul.f32 %v232, %v990
        %v1701 = vmul.f32 %v232, %v994
        %v1702 = vmul.f32 %v232, %v998
        %v1703 = vmul.f32 %v232, %v1002
        %v1704 = vmul.f32 %v232, %v1006
        %v1705 = vmul.f32 %v232, %v1010
        %v1706 = vmul.f32 %v232, %v1014
        %v1707 = vmul.f32 %v232, %v1018
        %v1708 = vmul.f32 %v232, %v1022
        %v1709 = vmul.f32 %v232, %v1026
        %v1710 = vmul.f32 %v232, %v1030
        %v1711 = vmul.f32 %v232, %v1034
        %v1712 = vmul.f32 %v232, %v1038
        %v1713 = vmul.f32 %v232, %v1042
        %v1714 = vmul.f32 %v232, %v1046
        %v1715 = vmul.f32 %v232, %v1050
        %v1716 = vmul.f32 %v232, %v1054
        %v1717 = vmul.f32 %v232, %v1058
        %v1718 = vmul.f32 %v232, %v1062
        %v1719 = vmul.f32 %v232, %v1066
        %v1720 = vmul.f32 %v232, %v1070
        %v1721 = vmul.f32 %v232, %v1074
        %v1722 = vmul.f32 %v232, %v1078
        %v1723 = vmul.f32 %v232, %v1082
        %v1724 = vmul.f32 %v232, %v1086
        %v1725 = vmul.f32 %v232, %v1090
        %v1726 = vmul.f32 %v232, %v1094
        %v1727 = vmul.f32 %v232, %v1098
        %v1728 = vmul.f32 %v232, %v1102
        %v1729 = vmul.f32 %v232, %v1106
        %v1730 = vmul.f32 %v232, %v1110
        %v1731 = vmul.f32 %v232, %v1114
        %v1732 = vmul.f32 %v232, %v1118
        %v1733 = vmul.f32 %v232, %v1122
        %v1734 = vmul.f32 %v232, %v1126
        %v1735 = vmul.f32 %v232, %v1130
        %v1736 = vmul.f32 %v232, %v1134
        %v1737 = vmul.f32 %v232, %v1138
        %v1738 = vmul.f32 %v232, %v1142
        %v1739 = vmul.f32 %v232, %v1146
        %v1740 = vmul.f32 %v232, %v1150
        %v1741 = vmul.f32 %v232, %v1154
        %v1742 = vmul.f32 %v232, %v1158
        %v1743 = vmul.f32 %v232, %v1162
        %v1744 = vmul.f32 %v232, %v1166
        %v1745 = vmul.f32 %v232, %v1170
        %v1746 = vmul.f32 %v232, %v1174
        %v1747 = vmul.f32 %v232, %v1178
        %v1748 = vmul.f32 %v232, %v1182
        %v1749 = vmul.f32 %v232, %v1186
        %v1750 = vmul.f32 %v232, %v1190
        %v1751 = vmul.f32 %v232, %v1194
        %v1752 = vmul.f32 %v232, %v1198
        %v1753 = vmul.f32 %v232, %v1202
        %v1754 = vmul.f32 %v232, %v1206
        %v1755 = vmul.f32 %v232, %v1210
        %v1756 = vmul.f32 %v232, %v1214
        %v1757 = vmul.f32 %v232, %v1218
        %v1758 = vmul.f32 %v232, %v1222
        %v1759 = vmul.f32 %v232, %v1226
        %v1760 = vmul.f32 %v232, %v1230
        %v1761 = vmul.f32 %v232, %v1234
        %v1762 = vmul.f32 %v232, %v1238
        %v1763 = vmul.f32 %v232, %v1242
        %v1764 = vmul.f32 %v232, %v1246
        %v1765 = vmul.f32 %v232, %v1250
        %v1766 = vmul.f32 %v232, %v1254
        %v1767 = vmul.f32 %v232, %v1258
        %v1768 = vmul.f32 %v232, %v1262
        %v1769 = vmul.f32 %v232, %v1266
        %v1770 = vmul.f32 %v232, %v1270
        %v1771 = vmul.f32 %v237, %v274
        %v1772 = vmul.f32 %v237, %v278
        %v1773 = vmul.f32 %v237, %v282
        %v1774 = vmul.f32 %v237, %v286
        %v1775 = vmul.f32 %v237, %v290
        %v1776 = vmul.f32 %v237, %v294
        %v1777 = vmul.f32 %v237, %v298
        %v1778 = vmul.f32 %v237, %v302
        %v1779 = vmul.f32 %v237, %v306
        %v1780 = vmul.f32 %v237, %v310
        %v1781 = vmul.f32 %v237, %v314
        %v1782 = vmul.f32 %v237, %v318
        %v1783 = vmul.f32 %v237, %v322
        %v1784 = vmul.f32 %v237, %v326
        %v1785 = vmul.f32 %v237, %v330
        %v1786 = vmul.f32 %v237, %v334
        %v1787 = vmul.f32 %v237, %v338
        %v1788 = vmul.f32 %v237, %v342
        %v1789 = vmul.f32 %v237, %v346
        %v1790 = vmul.f32 %v237, %v350
        %v1791 = vmul.f32 %v237, %v354
        %v1792 = vmul.f32 %v237, %v358
        %v1793 = vmul.f32 %v237, %v362
        %v1794 = vmul.f32 %v237, %v366
        %v1795 = vmul.f32 %v237, %v370
        %v1796 = vmul.f32 %v237, %v374
        %v1797 = vmul.f32 %v237, %v378
        %v1798 = vmul.f32 %v237, %v382
        %v1799 = vmul.f32 %v237, %v386
        %v1800 = vmul.f32 %v237, %v390
        %v1801 = vmul.f32 %v237, %v394
        %v1802 = vmul.f32 %v237, %v398
        %v1803 = vmul.f32 %v237, %v402
        %v1804 = vmul.f32 %v237, %v406
        %v1805 = vmul.f32 %v237, %v410
        %v1806 = vmul.f32 %v237, %v414
        %v1807 = vmul.f32 %v237, %v418
        %v1808 = vmul.f32 %v237, %v422
        %v1809 = vmul.f32 %v237, %v426
        %v1810 = vmul.f32 %v237, %v430
        %v1811 = vmul.f32 %v237, %v434
        %v1812 = vmul.f32 %v237, %v438
        %v1813 = vmul.f32 %v237, %v442
        %v1814 = vmul.f32 %v237, %v446
        %v1815 = vmul.f32 %v237, %v450
        %v1816 = vmul.f32 %v237, %v454
        %v1817 = vmul.f32 %v237, %v458
        %v1818 = vmul.f32 %v237, %v462
        %v1819 = vmul.f32 %v237, %v466
        %v1820 = vmul.f32 %v237, %v470
        %v1821 = vmul.f32 %v237, %v474
        %v1822 = vmul.f32 %v237, %v478
        %v1823 = vmul.f32 %v237, %v482
        %v1824 = vmul.f32 %v237, %v486
        %v1825 = vmul.f32 %v237, %v490
        %v1826 = vmul.f32 %v237, %v494
        %v1827 = vmul.f32 %v237, %v498
        %v1828 = vmul.f32 %v237, %v502
        %v1829 = vmul.f32 %v237, %v506
        %v1830 = vmul.f32 %v237, %v510
        %v1831 = vmul.f32 %v237, %v514
        %v1832 = vmul.f32 %v237, %v518
        %v1833 = vmul.f32 %v237, %v522
        %v1834 = vmul.f32 %v237, %v526
        %v1835 = vmul.f32 %v237, %v530
        %v1836 = vmul.f32 %v237, %v534
        %v1837 = vmul.f32 %v237, %v538
        %v1838 = vmul.f32 %v237, %v542
        %v1839 = vmul.f32 %v237, %v546
        %v1840 = vmul.f32 %v237, %v550
        %v1841 = vmul.f32 %v237, %v554
        %v1842 = vmul.f32 %v237, %v558
        %v1843 = vmul.f32 %v237, %v562
        %v1844 = vmul.f32 %v237, %v566
        %v1845 = vmul.f32 %v237, %v570
        %v1846 = vmul.f32 %v237, %v574
        %v1847 = vmul.f32 %v237, %v578
        %v1848 = vmul.f32 %v237, %v582
        %v1849 = vmul.f32 %v237, %v586
        %v1850 = vmul.f32 %v237, %v590
        %v1851 = vmul.f32 %v237, %v594
        %v1852 = vmul.f32 %v237, %v598
        %v1853 = vmul.f32 %v237, %v602
        %v1854 = vmul.f32 %v237, %v606
        %v1855 = vmul.f32 %v237, %v610
        %v1856 = vmul.f32 %v237, %v614
        %v1857 = vmul.f32 %v237, %v618
        %v1858 = vmul.f32 %v237, %v622
        %v1859 = vmul.f32 %v237, %v626
        %v1860 = vmul.f32 %v237, %v630
        %v1861 = vmul.f32 %v237, %v634
        %v1862 = vmul.f32 %v237, %v638
        %v1863 = vmul.f32 %v237, %v642
        %v1864 = vmul.f32 %v237, %v646
        %v1865 = vmul.f32 %v237, %v650
        %v1866 = vmul.f32 %v237, %v654
        %v1867 = vmul.f32 %v237, %v658
        %v1868 = vmul.f32 %v237, %v662
        %v1869 = vmul.f32 %v237, %v666
        %v1870 = vmul.f32 %v237, %v670
        %v1871 = vmul.f32 %v237, %v674
        %v1872 = vmul.f32 %v237, %v678
        %v1873 = vmul.f32 %v237, %v682
        %v1874 = vmul.f32 %v237, %v686
        %v1875 = vmul.f32 %v237, %v690
        %v1876 = vmul.f32 %v237, %v694
        %v1877 = vmul.f32 %v237, %v698
        %v1878 = vmul.f32 %v237, %v702
        %v1879 = vmul.f32 %v237, %v706
        %v1880 = vmul.f32 %v237, %v710
        %v1881 = vmul.f32 %v237, %v714
        %v1882 = vmul.f32 %v237, %v718
        %v1883 = vmul.f32 %v237, %v722
        %v1884 = vmul.f32 %v237, %v726
        %v1885 = vmul.f32 %v237, %v730
        %v1886 = vmul.f32 %v237, %v734
        %v1887 = vmul.f32 %v237, %v738
        %v1888 = vmul.f32 %v237, %v742
        %v1889 = vmul.f32 %v237, %v746
        %v1890 = vmul.f32 %v237, %v750
        %v1891 = vmul.f32 %v237, %v754
        %v1892 = vmul.f32 %v237, %v758
        %v1893 = vmul.f32 %v237, %v762
        %v1894 = vmul.f32 %v237, %v766
        %v1895 = vmul.f32 %v237, %v770
        %v1896 = vmul.f32 %v237, %v774
        %v1897 = vmul.f32 %v237, %v778
        %v1898 = vmul.f32 %v237, %v782
        %v1899 = vmul.f32 %v237, %v786
        %v1900 = vmul.f32 %v237, %v790
        %v1901 = vmul.f32 %v237, %v794
        %v1902 = vmul.f32 %v237, %v798
        %v1903 = vmul.f32 %v237, %v802
        %v1904 = vmul.f32 %v237, %v806
        %v1905 = vmul.f32 %v237, %v810
        %v1906 = vmul.f32 %v237, %v814
        %v1907 = vmul.f32 %v237, %v818
        %v1908 = vmul.f32 %v237, %v822
        %v1909 = vmul.f32 %v237, %v826
        %v1910 = vmul.f32 %v237, %v830
        %v1911 = vmul.f32 %v237, %v834
        %v1912 = vmul.f32 %v237, %v838
        %v1913 = vmul.f32 %v237, %v842
        %v1914 = vmul.f32 %v237, %v846
        %v1915 = vmul.f32 %v237, %v850
        %v1916 = vmul.f32 %v237, %v854
        %v1917 = vmul.f32 %v237, %v858
        %v1918 = vmul.f32 %v237, %v862
        %v1919 = vmul.f32 %v237, %v866
        %v1920 = vmul.f32 %v237, %v870
        %v1921 = vmul.f32 %v237, %v874
        %v1922 = vmul.f32 %v237, %v878
        %v1923 = vmul.f32 %v237, %v882
        %v1924 = vmul.f32 %v237, %v886
        %v1925 = vmul.f32 %v237, %v890
        %v1926 = vmul.f32 %v237, %v894
        %v1927 = vmul.f32 %v237, %v898
        %v1928 = vmul.f32 %v237, %v902
        %v1929 = vmul.f32 %v237, %v906
        %v1930 = vmul.f32 %v237, %v910
        %v1931 = vmul.f32 %v237, %v914
        %v1932 = vmul.f32 %v237, %v918
        %v1933 = vmul.f32 %v237, %v922
        %v1934 = vmul.f32 %v237, %v926
        %v1935 = vmul.f32 %v237, %v930
        %v1936 = vmul.f32 %v237, %v934
        %v1937 = vmul.f32 %v237, %v938
        %v1938 = vmul.f32 %v237, %v942
        %v1939 = vmul.f32 %v237, %v946
        %v1940 = vmul.f32 %v237, %v950
        %v1941 = vmul.f32 %v237, %v954
        %v1942 = vmul.f32 %v237, %v958
        %v1943 = vmul.f32 %v237, %v962
        %v1944 = vmul.f32 %v237, %v966
        %v1945 = vmul.f32 %v237, %v970
        %v1946 = vmul.f32 %v237, %v974
        %v1947 = vmul.f32 %v237, %v978
        %v1948 = vmul.f32 %v237, %v982
        %v1949 = vmul.f32 %v237, %v986
        %v1950 = vmul.f32 %v237, %v990
        %v1951 = vmul.f32 %v237, %v994
        %v1952 = vmul.f32 %v237, %v998
        %v1953 = vmul.f32 %v237, %v1002
        %v1954 = vmul.f32 %v237, %v1006
        %v1955 = vmul.f32 %v237, %v1010
        %v1956 = vmul.f32 %v237, %v1014
        %v1957 = vmul.f32 %v237, %v1018
        %v1958 = vmul.f32 %v237, %v1022
        %v1959 = vmul.f32 %v237, %v1026
        %v1960 = vmul.f32 %v237, %v1030
        %v1961 = vmul.f32 %v237, %v1034
        %v1962 = vmul.f32 %v237, %v1038
        %v1963 = vmul.f32 %v237, %v1042
        %v1964 = vmul.f32 %v237, %v1046
        %v1965 = vmul.f32 %v237, %v1050
        %v1966 = vmul.f32 %v237, %v1054
        %v1967 = vmul.f32 %v237, %v1058
        %v1968 = vmul.f32 %v237, %v1062
        %v1969 = vmul.f32 %v237, %v1066
        %v1970 = vmul.f32 %v237, %v1070
        %v1971 = vmul.f32 %v237, %v1074
        %v1972 = vmul.f32 %v237, %v1078
        %v1973 = vmul.f32 %v237, %v1082
        %v1974 = vmul.f32 %v237, %v1086
        %v1975 = vmul.f32 %v237, %v1090
        %v1976 = vmul.f32 %v237, %v1094
        %v1977 = vmul.f32 %v237, %v1098
        %v1978 = vmul.f32 %v237, %v1102
        %v1979 = vmul.f32 %v237, %v1106
        %v1980 = vmul.f32 %v237, %v1110
        %v1981 = vmul.f32 %v237, %v1114
        %v1982 = vmul.f32 %v237, %v1118
        %v1983 = vmul.f32 %v237, %v1122
        %v1984 = vmul.f32 %v237, %v1126
        %v1985 = vmul.f32 %v237, %v1130
        %v1986 = vmul.f32 %v237, %v1134
        %v1987 = vmul.f32 %v237, %v1138
        %v1988 = vmul.f32 %v237, %v1142
        %v1989 = vmul.f32 %v237, %v1146
        %v1990 = vmul.f32 %v237, %v1150
        %v1991 = vmul.f32 %v237, %v1154
        %v1992 = vmul.f32 %v237, %v1158
        %v1993 = vmul.f32 %v237, %v1162
        %v1994 = vmul.f32 %v237, %v1166
        %v1995 = vmul.f32 %v237, %v1170
        %v1996 = vmul.f32 %v237, %v1174
        %v1997 = vmul.f32 %v237, %v1178
        %v1998 = vmul.f32 %v237, %v1182
        %v1999 = vmul.f32 %v237, %v1186
        %v2000 = vmul.f32 %v237, %v1190
        %v2001 = vmul.f32 %v237, %v1194
        %v2002 = vmul.f32 %v237, %v1198
        %v2003 = vmul.f32 %v237, %v1202
        %v2004 = vmul.f32 %v237, %v1206
        %v2005 = vmul.f32 %v237, %v1210
        %v2006 = vmul.f32 %v237, %v1214
        %v2007 = vmul.f32 %v237, %v1218
        %v2008 = vmul.f32 %v237, %v1222
        %v2009 = vmul.f32 %v237, %v1226
        %v2010 = vmul.f32 %v237, %v1230
        %v2011 = vmul.f32 %v237, %v1234
        %v2012 = vmul.f32 %v237, %v1238
        %v2013 = vmul.f32 %v237, %v1242
        %v2014 = vmul.f32 %v237, %v1246
        %v2015 = vmul.f32 %v237, %v1250
        %v2016 = vmul.f32 %v237, %v1254
        %v2017 = vmul.f32 %v237, %v1258
        %v2018 = vmul.f32 %v237, %v1262
        %v2019 = vmul.f32 %v237, %v1266
        %v2020 = vmul.f32 %v237, %v1270
        %2021 = vst [vmem:[%s187] sm:$0xff] %v1521
        %2022 = vst [vmem:[%s187 + $0x8] sm:$0xff] %v1522
        %2023 = vst [vmem:[%s187 + $0x10] sm:$0xff] %v1523
        %2024 = vst [vmem:[%s187 + $0x18] sm:$0xff] %v1524
        %2025 = vst [vmem:[%s187 + $0x20] sm:$0xff] %v1525
        %2026 = vst [vmem:[%s187 + $0x28] sm:$0xff] %v1526
        %2027 = vst [vmem:[%s187 + $0x30] sm:$0xff] %v1527
        %2028 = vst [vmem:[%s187 + $0x38] sm:$0xff] %v1528
        %2029 = vst [vmem:[%s187 + $0x40] sm:$0xff] %v1529
        %2030 = vst [vmem:[%s187 + $0x48] sm:$0xff] %v1530
        %2031 = vst [vmem:[%s187 + $0x50] sm:$0xff] %v1531
        %2032 = vst [vmem:[%s187 + $0x58] sm:$0xff] %v1532
        %2033 = vst [vmem:[%s187 + $0x60] sm:$0xff] %v1533
        %2034 = vst [vmem:[%s187 + $0x68] sm:$0xff] %v1534
        %2035 = vst [vmem:[%s187 + $0x70] sm:$0xff] %v1535
        %2036 = vst [vmem:[%s187 + $0x78] sm:$0xff] %v1536
        %2037 = vst [vmem:[%s187 + $0x80] sm:$0xff] %v1537
        %2038 = vst [vmem:[%s187 + $0x88] sm:$0xff] %v1538
        %2039 = vst [vmem:[%s187 + $0x90] sm:$0xff] %v1539
        %2040 = vst [vmem:[%s187 + $0x98] sm:$0xff] %v1540
        %2041 = vst [vmem:[%s187 + $0xa0] sm:$0xff] %v1541
        %2042 = vst [vmem:[%s187 + $0xa8] sm:$0xff] %v1542
        %2043 = vst [vmem:[%s187 + $0xb0] sm:$0xff] %v1543
        %2044 = vst [vmem:[%s187 + $0xb8] sm:$0xff] %v1544
        %2045 = vst [vmem:[%s187 + $0xc0] sm:$0xff] %v1545
        %2046 = vst [vmem:[%s187 + $0xc8] sm:$0xff] %v1546
        %2047 = vst [vmem:[%s187 + $0xd0] sm:$0xff] %v1547
        %2048 = vst [vmem:[%s187 + $0xd8] sm:$0xff] %v1548
        %2049 = vst [vmem:[%s187 + $0xe0] sm:$0xff] %v1549
        %2050 = vst [vmem:[%s187 + $0xe8] sm:$0xff] %v1550
        %2051 = vst [vmem:[%s187 + $0xf0] sm:$0xff] %v1551
        %2052 = vst [vmem:[%s187 + $0xf8] sm:$0xff] %v1552
        %2053 = vst [vmem:[%s187 + $0x100] sm:$0xff] %v1553
        %2054 = vst [vmem:[%s187 + $0x108] sm:$0xff] %v1554
        %2055 = vst [vmem:[%s187 + $0x110] sm:$0xff] %v1555
        %2056 = vst [vmem:[%s187 + $0x118] sm:$0xff] %v1556
        %2057 = vst [vmem:[%s187 + $0x120] sm:$0xff] %v1557
        %2058 = vst [vmem:[%s187 + $0x128] sm:$0xff] %v1558
        %2059 = vst [vmem:[%s187 + $0x130] sm:$0xff] %v1559
        %2060 = vst [vmem:[%s187 + $0x138] sm:$0xff] %v1560
        %2061 = vst [vmem:[%s187 + $0x140] sm:$0xff] %v1561
        %2062 = vst [vmem:[%s187 + $0x148] sm:$0xff] %v1562
        %2063 = vst [vmem:[%s187 + $0x150] sm:$0xff] %v1563
        %2064 = vst [vmem:[%s187 + $0x158] sm:$0xff] %v1564
        %2065 = vst [vmem:[%s187 + $0x160] sm:$0xff] %v1565
        %2066 = vst [vmem:[%s187 + $0x168] sm:$0xff] %v1566
        %2067 = vst [vmem:[%s187 + $0x170] sm:$0xff] %v1567
        %2068 = vst [vmem:[%s187 + $0x178] sm:$0xff] %v1568
        %2069 = vst [vmem:[%s187 + $0x180] sm:$0xff] %v1569
        %2070 = vst [vmem:[%s187 + $0x188] sm:$0xff] %v1570
        %2071 = vst [vmem:[%s187 + $0x190] sm:$0xff] %v1571
        %2072 = vst [vmem:[%s187 + $0x198] sm:$0xff] %v1572
        %2073 = vst [vmem:[%s187 + $0x1a0] sm:$0xff] %v1573
        %2074 = vst [vmem:[%s187 + $0x1a8] sm:$0xff] %v1574
        %2075 = vst [vmem:[%s187 + $0x1b0] sm:$0xff] %v1575
        %2076 = vst [vmem:[%s187 + $0x1b8] sm:$0xff] %v1576
        %2077 = vst [vmem:[%s187 + $0x1c0] sm:$0xff] %v1577
        %2078 = vst [vmem:[%s187 + $0x1c8] sm:$0xff] %v1578
        %2079 = vst [vmem:[%s187 + $0x1d0] sm:$0xff] %v1579
        %2080 = vst [vmem:[%s187 + $0x1d8] sm:$0xff] %v1580
        %2081 = vst [vmem:[%s187 + $0x1e0] sm:$0xff] %v1581
        %2082 = vst [vmem:[%s187 + $0x1e8] sm:$0xff] %v1582
        %2083 = vst [vmem:[%s187 + $0x1f0] sm:$0xff] %v1583
        %2084 = vst [vmem:[%s187 + $0x1f8] sm:$0xff] %v1584
        %2085 = vst [vmem:[%s187 + $0x200] sm:$0xff] %v1585
        %2086 = vst [vmem:[%s187 + $0x208] sm:$0xff] %v1586
        %2087 = vst [vmem:[%s187 + $0x210] sm:$0xff] %v1587
        %2088 = vst [vmem:[%s187 + $0x218] sm:$0xff] %v1588
        %2089 = vst [vmem:[%s187 + $0x220] sm:$0xff] %v1589
        %2090 = vst [vmem:[%s187 + $0x228] sm:$0xff] %v1590
        %2091 = vst [vmem:[%s187 + $0x230] sm:$0xff] %v1591
        %2092 = vst [vmem:[%s187 + $0x238] sm:$0xff] %v1592
        %2093 = vst [vmem:[%s187 + $0x240] sm:$0xff] %v1593
        %2094 = vst [vmem:[%s187 + $0x248] sm:$0xff] %v1594
        %2095 = vst [vmem:[%s187 + $0x250] sm:$0xff] %v1595
        %2096 = vst [vmem:[%s187 + $0x258] sm:$0xff] %v1596
        %2097 = vst [vmem:[%s187 + $0x260] sm:$0xff] %v1597
        %2098 = vst [vmem:[%s187 + $0x268] sm:$0xff] %v1598
        %2099 = vst [vmem:[%s187 + $0x270] sm:$0xff] %v1599
        %2100 = vst [vmem:[%s187 + $0x278] sm:$0xff] %v1600
        %2101 = vst [vmem:[%s187 + $0x280] sm:$0xff] %v1601
        %2102 = vst [vmem:[%s187 + $0x288] sm:$0xff] %v1602
        %2103 = vst [vmem:[%s187 + $0x290] sm:$0xff] %v1603
        %2104 = vst [vmem:[%s187 + $0x298] sm:$0xff] %v1604
        %2105 = vst [vmem:[%s187 + $0x2a0] sm:$0xff] %v1605
        %2106 = vst [vmem:[%s187 + $0x2a8] sm:$0xff] %v1606
        %2107 = vst [vmem:[%s187 + $0x2b0] sm:$0xff] %v1607
        %2108 = vst [vmem:[%s187 + $0x2b8] sm:$0xff] %v1608
        %2109 = vst [vmem:[%s187 + $0x2c0] sm:$0xff] %v1609
        %2110 = vst [vmem:[%s187 + $0x2c8] sm:$0xff] %v1610
        %2111 = vst [vmem:[%s187 + $0x2d0] sm:$0xff] %v1611
        %2112 = vst [vmem:[%s187 + $0x2d8] sm:$0xff] %v1612
        %2113 = vst [vmem:[%s187 + $0x2e0] sm:$0xff] %v1613
        %2114 = vst [vmem:[%s187 + $0x2e8] sm:$0xff] %v1614
        %2115 = vst [vmem:[%s187 + $0x2f0] sm:$0xff] %v1615
        %2116 = vst [vmem:[%s187 + $0x2f8] sm:$0xff] %v1616
        %2117 = vst [vmem:[%s187 + $0x300] sm:$0xff] %v1617
        %2118 = vst [vmem:[%s187 + $0x308] sm:$0xff] %v1618
        %2119 = vst [vmem:[%s187 + $0x310] sm:$0xff] %v1619
        %2120 = vst [vmem:[%s187 + $0x318] sm:$0xff] %v1620
        %2121 = vst [vmem:[%s187 + $0x320] sm:$0xff] %v1621
        %2122 = vst [vmem:[%s187 + $0x328] sm:$0xff] %v1622
        %2123 = vst [vmem:[%s187 + $0x330] sm:$0xff] %v1623
        %2124 = vst [vmem:[%s187 + $0x338] sm:$0xff] %v1624
        %2125 = vst [vmem:[%s187 + $0x340] sm:$0xff] %v1625
        %2126 = vst [vmem:[%s187 + $0x348] sm:$0xff] %v1626
        %2127 = vst [vmem:[%s187 + $0x350] sm:$0xff] %v1627
        %2128 = vst [vmem:[%s187 + $0x358] sm:$0xff] %v1628
        %2129 = vst [vmem:[%s187 + $0x360] sm:$0xff] %v1629
        %2130 = vst [vmem:[%s187 + $0x368] sm:$0xff] %v1630
        %2131 = vst [vmem:[%s187 + $0x370] sm:$0xff] %v1631
        %2132 = vst [vmem:[%s187 + $0x378] sm:$0xff] %v1632
        %2133 = vst [vmem:[%s187 + $0x380] sm:$0xff] %v1633
        %2134 = vst [vmem:[%s187 + $0x388] sm:$0xff] %v1634
        %2135 = vst [vmem:[%s187 + $0x390] sm:$0xff] %v1635
        %2136 = vst [vmem:[%s187 + $0x398] sm:$0xff] %v1636
        %2137 = vst [vmem:[%s187 + $0x3a0] sm:$0xff] %v1637
        %2138 = vst [vmem:[%s187 + $0x3a8] sm:$0xff] %v1638
        %2139 = vst [vmem:[%s187 + $0x3b0] sm:$0xff] %v1639
        %2140 = vst [vmem:[%s187 + $0x3b8] sm:$0xff] %v1640
        %2141 = vst [vmem:[%s187 + $0x3c0] sm:$0xff] %v1641
        %2142 = vst [vmem:[%s187 + $0x3c8] sm:$0xff] %v1642
        %2143 = vst [vmem:[%s187 + $0x3d0] sm:$0xff] %v1643
        %2144 = vst [vmem:[%s187 + $0x3d8] sm:$0xff] %v1644
        %2145 = vst [vmem:[%s187 + $0x3e0] sm:$0xff] %v1645
        %2146 = vst [vmem:[%s187 + $0x3e8] sm:$0xff] %v1646
        %2147 = vst [vmem:[%s187 + $0x3f0] sm:$0xff] %v1647
        %2148 = vst [vmem:[%s187 + $0x3f8] sm:$0xff] %v1648
        %2149 = vst [vmem:[%s187 + $0x400] sm:$0xff] %v1649
        %2150 = vst [vmem:[%s187 + $0x408] sm:$0xff] %v1650
        %2151 = vst [vmem:[%s187 + $0x410] sm:$0xff] %v1651
        %2152 = vst [vmem:[%s187 + $0x418] sm:$0xff] %v1652
        %2153 = vst [vmem:[%s187 + $0x420] sm:$0xff] %v1653
        %2154 = vst [vmem:[%s187 + $0x428] sm:$0xff] %v1654
        %2155 = vst [vmem:[%s187 + $0x430] sm:$0xff] %v1655
        %2156 = vst [vmem:[%s187 + $0x438] sm:$0xff] %v1656
        %2157 = vst [vmem:[%s187 + $0x440] sm:$0xff] %v1657
        %2158 = vst [vmem:[%s187 + $0x448] sm:$0xff] %v1658
        %2159 = vst [vmem:[%s187 + $0x450] sm:$0xff] %v1659
        %2160 = vst [vmem:[%s187 + $0x458] sm:$0xff] %v1660
        %2161 = vst [vmem:[%s187 + $0x460] sm:$0xff] %v1661
        %2162 = vst [vmem:[%s187 + $0x468] sm:$0xff] %v1662
        %2163 = vst [vmem:[%s187 + $0x470] sm:$0xff] %v1663
        %2164 = vst [vmem:[%s187 + $0x478] sm:$0xff] %v1664
        %2165 = vst [vmem:[%s187 + $0x480] sm:$0xff] %v1665
        %2166 = vst [vmem:[%s187 + $0x488] sm:$0xff] %v1666
        %2167 = vst [vmem:[%s187 + $0x490] sm:$0xff] %v1667
        %2168 = vst [vmem:[%s187 + $0x498] sm:$0xff] %v1668
        %2169 = vst [vmem:[%s187 + $0x4a0] sm:$0xff] %v1669
        %2170 = vst [vmem:[%s187 + $0x4a8] sm:$0xff] %v1670
        %2171 = vst [vmem:[%s187 + $0x4b0] sm:$0xff] %v1671
        %2172 = vst [vmem:[%s187 + $0x4b8] sm:$0xff] %v1672
        %2173 = vst [vmem:[%s187 + $0x4c0] sm:$0xff] %v1673
        %2174 = vst [vmem:[%s187 + $0x4c8] sm:$0xff] %v1674
        %2175 = vst [vmem:[%s187 + $0x4d0] sm:$0xff] %v1675
        %2176 = vst [vmem:[%s187 + $0x4d8] sm:$0xff] %v1676
        %2177 = vst [vmem:[%s187 + $0x4e0] sm:$0xff] %v1677
        %2178 = vst [vmem:[%s187 + $0x4e8] sm:$0xff] %v1678
        %2179 = vst [vmem:[%s187 + $0x4f0] sm:$0xff] %v1679
        %2180 = vst [vmem:[%s187 + $0x4f8] sm:$0xff] %v1680
        %2181 = vst [vmem:[%s187 + $0x500] sm:$0xff] %v1681
        %2182 = vst [vmem:[%s187 + $0x508] sm:$0xff] %v1682
        %2183 = vst [vmem:[%s187 + $0x510] sm:$0xff] %v1683
        %2184 = vst [vmem:[%s187 + $0x518] sm:$0xff] %v1684
        %2185 = vst [vmem:[%s187 + $0x520] sm:$0xff] %v1685
        %2186 = vst [vmem:[%s187 + $0x528] sm:$0xff] %v1686
        %2187 = vst [vmem:[%s187 + $0x530] sm:$0xff] %v1687
        %2188 = vst [vmem:[%s187 + $0x538] sm:$0xff] %v1688
        %2189 = vst [vmem:[%s187 + $0x540] sm:$0xff] %v1689
        %2190 = vst [vmem:[%s187 + $0x548] sm:$0xff] %v1690
        %2191 = vst [vmem:[%s187 + $0x550] sm:$0xff] %v1691
        %2192 = vst [vmem:[%s187 + $0x558] sm:$0xff] %v1692
        %2193 = vst [vmem:[%s187 + $0x560] sm:$0xff] %v1693
        %2194 = vst [vmem:[%s187 + $0x568] sm:$0xff] %v1694
        %2195 = vst [vmem:[%s187 + $0x570] sm:$0xff] %v1695
        %2196 = vst [vmem:[%s187 + $0x578] sm:$0xff] %v1696
        %2197 = vst [vmem:[%s187 + $0x580] sm:$0xff] %v1697
        %2198 = vst [vmem:[%s187 + $0x588] sm:$0xff] %v1698
        %2199 = vst [vmem:[%s187 + $0x590] sm:$0xff] %v1699
        %2200 = vst [vmem:[%s187 + $0x598] sm:$0xff] %v1700
        %2201 = vst [vmem:[%s187 + $0x5a0] sm:$0xff] %v1701
        %2202 = vst [vmem:[%s187 + $0x5a8] sm:$0xff] %v1702
        %2203 = vst [vmem:[%s187 + $0x5b0] sm:$0xff] %v1703
        %2204 = vst [vmem:[%s187 + $0x5b8] sm:$0xff] %v1704
        %2205 = vst [vmem:[%s187 + $0x5c0] sm:$0xff] %v1705
        %2206 = vst [vmem:[%s187 + $0x5c8] sm:$0xff] %v1706
        %2207 = vst [vmem:[%s187 + $0x5d0] sm:$0xff] %v1707
        %2208 = vst [vmem:[%s187 + $0x5d8] sm:$0xff] %v1708
        %2209 = vst [vmem:[%s187 + $0x5e0] sm:$0xff] %v1709
        %2210 = vst [vmem:[%s187 + $0x5e8] sm:$0xff] %v1710
        %2211 = vst [vmem:[%s187 + $0x5f0] sm:$0xff] %v1711
        %2212 = vst [vmem:[%s187 + $0x5f8] sm:$0xff] %v1712
        %2213 = vst [vmem:[%s187 + $0x600] sm:$0xff] %v1713
        %2214 = vst [vmem:[%s187 + $0x608] sm:$0xff] %v1714
        %2215 = vst [vmem:[%s187 + $0x610] sm:$0xff] %v1715
        %2216 = vst [vmem:[%s187 + $0x618] sm:$0xff] %v1716
        %2217 = vst [vmem:[%s187 + $0x620] sm:$0xff] %v1717
        %2218 = vst [vmem:[%s187 + $0x628] sm:$0xff] %v1718
        %2219 = vst [vmem:[%s187 + $0x630] sm:$0xff] %v1719
        %2220 = vst [vmem:[%s187 + $0x638] sm:$0xff] %v1720
        %2221 = vst [vmem:[%s187 + $0x640] sm:$0xff] %v1721
        %2222 = vst [vmem:[%s187 + $0x648] sm:$0xff] %v1722
        %2223 = vst [vmem:[%s187 + $0x650] sm:$0xff] %v1723
        %2224 = vst [vmem:[%s187 + $0x658] sm:$0xff] %v1724
        %2225 = vst [vmem:[%s187 + $0x660] sm:$0xff] %v1725
        %2226 = vst [vmem:[%s187 + $0x668] sm:$0xff] %v1726
        %2227 = vst [vmem:[%s187 + $0x670] sm:$0xff] %v1727
        %2228 = vst [vmem:[%s187 + $0x678] sm:$0xff] %v1728
        %2229 = vst [vmem:[%s187 + $0x680] sm:$0xff] %v1729
        %2230 = vst [vmem:[%s187 + $0x688] sm:$0xff] %v1730
        %2231 = vst [vmem:[%s187 + $0x690] sm:$0xff] %v1731
        %2232 = vst [vmem:[%s187 + $0x698] sm:$0xff] %v1732
        %2233 = vst [vmem:[%s187 + $0x6a0] sm:$0xff] %v1733
        %2234 = vst [vmem:[%s187 + $0x6a8] sm:$0xff] %v1734
        %2235 = vst [vmem:[%s187 + $0x6b0] sm:$0xff] %v1735
        %2236 = vst [vmem:[%s187 + $0x6b8] sm:$0xff] %v1736
        %2237 = vst [vmem:[%s187 + $0x6c0] sm:$0xff] %v1737
        %2238 = vst [vmem:[%s187 + $0x6c8] sm:$0xff] %v1738
        %2239 = vst [vmem:[%s187 + $0x6d0] sm:$0xff] %v1739
        %2240 = vst [vmem:[%s187 + $0x6d8] sm:$0xff] %v1740
        %2241 = vst [vmem:[%s187 + $0x6e0] sm:$0xff] %v1741
        %2242 = vst [vmem:[%s187 + $0x6e8] sm:$0xff] %v1742
        %2243 = vst [vmem:[%s187 + $0x6f0] sm:$0xff] %v1743
        %2244 = vst [vmem:[%s187 + $0x6f8] sm:$0xff] %v1744
        %2245 = vst [vmem:[%s187 + $0x700] sm:$0xff] %v1745
        %2246 = vst [vmem:[%s187 + $0x708] sm:$0xff] %v1746
        %2247 = vst [vmem:[%s187 + $0x710] sm:$0xff] %v1747
        %2248 = vst [vmem:[%s187 + $0x718] sm:$0xff] %v1748
        %2249 = vst [vmem:[%s187 + $0x720] sm:$0xff] %v1749
        %2250 = vst [vmem:[%s187 + $0x728] sm:$0xff] %v1750
        %2251 = vst [vmem:[%s187 + $0x730] sm:$0xff] %v1751
        %2252 = vst [vmem:[%s187 + $0x738] sm:$0xff] %v1752
        %2253 = vst [vmem:[%s187 + $0x740] sm:$0xff] %v1753
        %2254 = vst [vmem:[%s187 + $0x748] sm:$0xff] %v1754
        %2255 = vst [vmem:[%s187 + $0x750] sm:$0xff] %v1755
        %2256 = vst [vmem:[%s187 + $0x758] sm:$0xff] %v1756
        %2257 = vst [vmem:[%s187 + $0x760] sm:$0xff] %v1757
        %2258 = vst [vmem:[%s187 + $0x768] sm:$0xff] %v1758
        %2259 = vst [vmem:[%s187 + $0x770] sm:$0xff] %v1759
        %2260 = vst [vmem:[%s187 + $0x778] sm:$0xff] %v1760
        %2261 = vst [vmem:[%s187 + $0x780] sm:$0xff] %v1761
        %2262 = vst [vmem:[%s187 + $0x788] sm:$0xff] %v1762
        %2263 = vst [vmem:[%s187 + $0x790] sm:$0xff] %v1763
        %2264 = vst [vmem:[%s187 + $0x798] sm:$0xff] %v1764
        %2265 = vst [vmem:[%s187 + $0x7a0] sm:$0xff] %v1765
        %2266 = vst [vmem:[%s187 + $0x7a8] sm:$0xff] %v1766
        %2267 = vst [vmem:[%s187 + $0x7b0] sm:$0xff] %v1767
        %2268 = vst [vmem:[%s187 + $0x7b8] sm:$0xff] %v1768
        %2269 = vst [vmem:[%s187 + $0x7c0] sm:$0xff] %v1769
        %2270 = vst [vmem:[%s187 + $0x7c8] sm:$0xff] %v1770
        %2271 = vst [vmem:[%s187 + $0x7d0] sm:$0xff] %v1771
        %2272 = vst [vmem:[%s187 + $0x7d8] sm:$0xff] %v1772
        %2273 = vst [vmem:[%s187 + $0x7e0] sm:$0xff] %v1773
        %2274 = vst [vmem:[%s187 + $0x7e8] sm:$0xff] %v1774
        %2275 = vst [vmem:[%s187 + $0x7f0] sm:$0xff] %v1775
        %2276 = vst [vmem:[%s187 + $0x7f8] sm:$0xff] %v1776
        %2277 = vst [vmem:[%s187 + $0x800] sm:$0xff] %v1777
        %2278 = vst [vmem:[%s187 + $0x808] sm:$0xff] %v1778
        %2279 = vst [vmem:[%s187 + $0x810] sm:$0xff] %v1779
        %2280 = vst [vmem:[%s187 + $0x818] sm:$0xff] %v1780
        %2281 = vst [vmem:[%s187 + $0x820] sm:$0xff] %v1781
        %2282 = vst [vmem:[%s187 + $0x828] sm:$0xff] %v1782
        %2283 = vst [vmem:[%s187 + $0x830] sm:$0xff] %v1783
        %2284 = vst [vmem:[%s187 + $0x838] sm:$0xff] %v1784
        %2285 = vst [vmem:[%s187 + $0x840] sm:$0xff] %v1785
        %2286 = vst [vmem:[%s187 + $0x848] sm:$0xff] %v1786
        %2287 = vst [vmem:[%s187 + $0x850] sm:$0xff] %v1787
        %2288 = vst [vmem:[%s187 + $0x858] sm:$0xff] %v1788
        %2289 = vst [vmem:[%s187 + $0x860] sm:$0xff] %v1789
        %2290 = vst [vmem:[%s187 + $0x868] sm:$0xff] %v1790
        %2291 = vst [vmem:[%s187 + $0x870] sm:$0xff] %v1791
        %2292 = vst [vmem:[%s187 + $0x878] sm:$0xff] %v1792
        %2293 = vst [vmem:[%s187 + $0x880] sm:$0xff] %v1793
        %2294 = vst [vmem:[%s187 + $0x888] sm:$0xff] %v1794
        %2295 = vst [vmem:[%s187 + $0x890] sm:$0xff] %v1795
        %2296 = vst [vmem:[%s187 + $0x898] sm:$0xff] %v1796
        %2297 = vst [vmem:[%s187 + $0x8a0] sm:$0xff] %v1797
        %2298 = vst [vmem:[%s187 + $0x8a8] sm:$0xff] %v1798
        %2299 = vst [vmem:[%s187 + $0x8b0] sm:$0xff] %v1799
        %2300 = vst [vmem:[%s187 + $0x8b8] sm:$0xff] %v1800
        %2301 = vst [vmem:[%s187 + $0x8c0] sm:$0xff] %v1801
        %2302 = vst [vmem:[%s187 + $0x8c8] sm:$0xff] %v1802
        %2303 = vst [vmem:[%s187 + $0x8d0] sm:$0xff] %v1803
        %2304 = vst [vmem:[%s187 + $0x8d8] sm:$0xff] %v1804
        %2305 = vst [vmem:[%s187 + $0x8e0] sm:$0xff] %v1805
        %2306 = vst [vmem:[%s187 + $0x8e8] sm:$0xff] %v1806
        %2307 = vst [vmem:[%s187 + $0x8f0] sm:$0xff] %v1807
        %2308 = vst [vmem:[%s187 + $0x8f8] sm:$0xff] %v1808
        %2309 = vst [vmem:[%s187 + $0x900] sm:$0xff] %v1809
        %2310 = vst [vmem:[%s187 + $0x908] sm:$0xff] %v1810
        %2311 = vst [vmem:[%s187 + $0x910] sm:$0xff] %v1811
        %2312 = vst [vmem:[%s187 + $0x918] sm:$0xff] %v1812
        %2313 = vst [vmem:[%s187 + $0x920] sm:$0xff] %v1813
        %2314 = vst [vmem:[%s187 + $0x928] sm:$0xff] %v1814
        %2315 = vst [vmem:[%s187 + $0x930] sm:$0xff] %v1815
        %2316 = vst [vmem:[%s187 + $0x938] sm:$0xff] %v1816
        %2317 = vst [vmem:[%s187 + $0x940] sm:$0xff] %v1817
        %2318 = vst [vmem:[%s187 + $0x948] sm:$0xff] %v1818
        %2319 = vst [vmem:[%s187 + $0x950] sm:$0xff] %v1819
        %2320 = vst [vmem:[%s187 + $0x958] sm:$0xff] %v1820
        %2321 = vst [vmem:[%s187 + $0x960] sm:$0xff] %v1821
        %2322 = vst [vmem:[%s187 + $0x968] sm:$0xff] %v1822
        %2323 = vst [vmem:[%s187 + $0x970] sm:$0xff] %v1823
        %2324 = vst [vmem:[%s187 + $0x978] sm:$0xff] %v1824
        %2325 = vst [vmem:[%s187 + $0x980] sm:$0xff] %v1825
        %2326 = vst [vmem:[%s187 + $0x988] sm:$0xff] %v1826
        %2327 = vst [vmem:[%s187 + $0x990] sm:$0xff] %v1827
        %2328 = vst [vmem:[%s187 + $0x998] sm:$0xff] %v1828
        %2329 = vst [vmem:[%s187 + $0x9a0] sm:$0xff] %v1829
        %2330 = vst [vmem:[%s187 + $0x9a8] sm:$0xff] %v1830
        %2331 = vst [vmem:[%s187 + $0x9b0] sm:$0xff] %v1831
        %2332 = vst [vmem:[%s187 + $0x9b8] sm:$0xff] %v1832
        %2333 = vst [vmem:[%s187 + $0x9c0] sm:$0xff] %v1833
        %2334 = vst [vmem:[%s187 + $0x9c8] sm:$0xff] %v1834
        %2335 = vst [vmem:[%s187 + $0x9d0] sm:$0xff] %v1835
        %2336 = vst [vmem:[%s187 + $0x9d8] sm:$0xff] %v1836
        %2337 = vst [vmem:[%s187 + $0x9e0] sm:$0xff] %v1837
        %2338 = vst [vmem:[%s187 + $0x9e8] sm:$0xff] %v1838
        %2339 = vst [vmem:[%s187 + $0x9f0] sm:$0xff] %v1839
        %2340 = vst [vmem:[%s187 + $0x9f8] sm:$0xff] %v1840
        %2341 = vst [vmem:[%s187 + $0xa00] sm:$0xff] %v1841
        %2342 = vst [vmem:[%s187 + $0xa08] sm:$0xff] %v1842
        %2343 = vst [vmem:[%s187 + $0xa10] sm:$0xff] %v1843
        %2344 = vst [vmem:[%s187 + $0xa18] sm:$0xff] %v1844
        %2345 = vst [vmem:[%s187 + $0xa20] sm:$0xff] %v1845
        %2346 = vst [vmem:[%s187 + $0xa28] sm:$0xff] %v1846
        %2347 = vst [vmem:[%s187 + $0xa30] sm:$0xff] %v1847
        %2348 = vst [vmem:[%s187 + $0xa38] sm:$0xff] %v1848
        %2349 = vst [vmem:[%s187 + $0xa40] sm:$0xff] %v1849
        %2350 = vst [vmem:[%s187 + $0xa48] sm:$0xff] %v1850
        %2351 = vst [vmem:[%s187 + $0xa50] sm:$0xff] %v1851
        %2352 = vst [vmem:[%s187 + $0xa58] sm:$0xff] %v1852
        %2353 = vst [vmem:[%s187 + $0xa60] sm:$0xff] %v1853
        %2354 = vst [vmem:[%s187 + $0xa68] sm:$0xff] %v1854
        %2355 = vst [vmem:[%s187 + $0xa70] sm:$0xff] %v1855
        %2356 = vst [vmem:[%s187 + $0xa78] sm:$0xff] %v1856
        %2357 = vst [vmem:[%s187 + $0xa80] sm:$0xff] %v1857
        %2358 = vst [vmem:[%s187 + $0xa88] sm:$0xff] %v1858
        %2359 = vst [vmem:[%s187 + $0xa90] sm:$0xff] %v1859
        %2360 = vst [vmem:[%s187 + $0xa98] sm:$0xff] %v1860
        %2361 = vst [vmem:[%s187 + $0xaa0] sm:$0xff] %v1861
        %2362 = vst [vmem:[%s187 + $0xaa8] sm:$0xff] %v1862
        %2363 = vst [vmem:[%s187 + $0xab0] sm:$0xff] %v1863
        %2364 = vst [vmem:[%s187 + $0xab8] sm:$0xff] %v1864
        %2365 = vst [vmem:[%s187 + $0xac0] sm:$0xff] %v1865
        %2366 = vst [vmem:[%s187 + $0xac8] sm:$0xff] %v1866
        %2367 = vst [vmem:[%s187 + $0xad0] sm:$0xff] %v1867
        %2368 = vst [vmem:[%s187 + $0xad8] sm:$0xff] %v1868
        %2369 = vst [vmem:[%s187 + $0xae0] sm:$0xff] %v1869
        %2370 = vst [vmem:[%s187 + $0xae8] sm:$0xff] %v1870
        %2371 = vst [vmem:[%s187 + $0xaf0] sm:$0xff] %v1871
        %2372 = vst [vmem:[%s187 + $0xaf8] sm:$0xff] %v1872
        %2373 = vst [vmem:[%s187 + $0xb00] sm:$0xff] %v1873
        %2374 = vst [vmem:[%s187 + $0xb08] sm:$0xff] %v1874
        %2375 = vst [vmem:[%s187 + $0xb10] sm:$0xff] %v1875
        %2376 = vst [vmem:[%s187 + $0xb18] sm:$0xff] %v1876
        %2377 = vst [vmem:[%s187 + $0xb20] sm:$0xff] %v1877
        %2378 = vst [vmem:[%s187 + $0xb28] sm:$0xff] %v1878
        %2379 = vst [vmem:[%s187 + $0xb30] sm:$0xff] %v1879
        %2380 = vst [vmem:[%s187 + $0xb38] sm:$0xff] %v1880
        %2381 = vst [vmem:[%s187 + $0xb40] sm:$0xff] %v1881
        %2382 = vst [vmem:[%s187 + $0xb48] sm:$0xff] %v1882
        %2383 = vst [vmem:[%s187 + $0xb50] sm:$0xff] %v1883
        %2384 = vst [vmem:[%s187 + $0xb58] sm:$0xff] %v1884
        %2385 = vst [vmem:[%s187 + $0xb60] sm:$0xff] %v1885
        %2386 = vst [vmem:[%s187 + $0xb68] sm:$0xff] %v1886
        %2387 = vst [vmem:[%s187 + $0xb70] sm:$0xff] %v1887
        %2388 = vst [vmem:[%s187 + $0xb78] sm:$0xff] %v1888
        %2389 = vst [vmem:[%s187 + $0xb80] sm:$0xff] %v1889
        %2390 = vst [vmem:[%s187 + $0xb88] sm:$0xff] %v1890
        %2391 = vst [vmem:[%s187 + $0xb90] sm:$0xff] %v1891
        %2392 = vst [vmem:[%s187 + $0xb98] sm:$0xff] %v1892
        %2393 = vst [vmem:[%s187 + $0xba0] sm:$0xff] %v1893
        %2394 = vst [vmem:[%s187 + $0xba8] sm:$0xff] %v1894
        %2395 = vst [vmem:[%s187 + $0xbb0] sm:$0xff] %v1895
        %2396 = vst [vmem:[%s187 + $0xbb8] sm:$0xff] %v1896
        %2397 = vst [vmem:[%s187 + $0xbc0] sm:$0xff] %v1897
        %2398 = vst [vmem:[%s187 + $0xbc8] sm:$0xff] %v1898
        %2399 = vst [vmem:[%s187 + $0xbd0] sm:$0xff] %v1899
        %2400 = vst [vmem:[%s187 + $0xbd8] sm:$0xff] %v1900
        %2401 = vst [vmem:[%s187 + $0xbe0] sm:$0xff] %v1901
        %2402 = vst [vmem:[%s187 + $0xbe8] sm:$0xff] %v1902
        %2403 = vst [vmem:[%s187 + $0xbf0] sm:$0xff] %v1903
        %2404 = vst [vmem:[%s187 + $0xbf8] sm:$0xff] %v1904
        %2405 = vst [vmem:[%s187 + $0xc00] sm:$0xff] %v1905
        %2406 = vst [vmem:[%s187 + $0xc08] sm:$0xff] %v1906
        %2407 = vst [vmem:[%s187 + $0xc10] sm:$0xff] %v1907
        %2408 = vst [vmem:[%s187 + $0xc18] sm:$0xff] %v1908
        %2409 = vst [vmem:[%s187 + $0xc20] sm:$0xff] %v1909
        %2410 = vst [vmem:[%s187 + $0xc28] sm:$0xff] %v1910
        %2411 = vst [vmem:[%s187 + $0xc30] sm:$0xff] %v1911
        %2412 = vst [vmem:[%s187 + $0xc38] sm:$0xff] %v1912
        %2413 = vst [vmem:[%s187 + $0xc40] sm:$0xff] %v1913
        %2414 = vst [vmem:[%s187 + $0xc48] sm:$0xff] %v1914
        %2415 = vst [vmem:[%s187 + $0xc50] sm:$0xff] %v1915
        %2416 = vst [vmem:[%s187 + $0xc58] sm:$0xff] %v1916
        %2417 = vst [vmem:[%s187 + $0xc60] sm:$0xff] %v1917
        %2418 = vst [vmem:[%s187 + $0xc68] sm:$0xff] %v1918
        %2419 = vst [vmem:[%s187 + $0xc70] sm:$0xff] %v1919
        %2420 = vst [vmem:[%s187 + $0xc78] sm:$0xff] %v1920
        %2421 = vst [vmem:[%s187 + $0xc80] sm:$0xff] %v1921
        %2422 = vst [vmem:[%s187 + $0xc88] sm:$0xff] %v1922
        %2423 = vst [vmem:[%s187 + $0xc90] sm:$0xff] %v1923
        %2424 = vst [vmem:[%s187 + $0xc98] sm:$0xff] %v1924
        %2425 = vst [vmem:[%s187 + $0xca0] sm:$0xff] %v1925
        %2426 = vst [vmem:[%s187 + $0xca8] sm:$0xff] %v1926
        %2427 = vst [vmem:[%s187 + $0xcb0] sm:$0xff] %v1927
        %2428 = vst [vmem:[%s187 + $0xcb8] sm:$0xff] %v1928
        %2429 = vst [vmem:[%s187 + $0xcc0] sm:$0xff] %v1929
        %2430 = vst [vmem:[%s187 + $0xcc8] sm:$0xff] %v1930
        %2431 = vst [vmem:[%s187 + $0xcd0] sm:$0xff] %v1931
        %2432 = vst [vmem:[%s187 + $0xcd8] sm:$0xff] %v1932
        %2433 = vst [vmem:[%s187 + $0xce0] sm:$0xff] %v1933
        %2434 = vst [vmem:[%s187 + $0xce8] sm:$0xff] %v1934
        %2435 = vst [vmem:[%s187 + $0xcf0] sm:$0xff] %v1935
        %2436 = vst [vmem:[%s187 + $0xcf8] sm:$0xff] %v1936
        %2437 = vst [vmem:[%s187 + $0xd00] sm:$0xff] %v1937
        %2438 = vst [vmem:[%s187 + $0xd08] sm:$0xff] %v1938
        %2439 = vst [vmem:[%s187 + $0xd10] sm:$0xff] %v1939
        %2440 = vst [vmem:[%s187 + $0xd18] sm:$0xff] %v1940
        %2441 = vst [vmem:[%s187 + $0xd20] sm:$0xff] %v1941
        %2442 = vst [vmem:[%s187 + $0xd28] sm:$0xff] %v1942
        %2443 = vst [vmem:[%s187 + $0xd30] sm:$0xff] %v1943
        %2444 = vst [vmem:[%s187 + $0xd38] sm:$0xff] %v1944
        %2445 = vst [vmem:[%s187 + $0xd40] sm:$0xff] %v1945
        %2446 = vst [vmem:[%s187 + $0xd48] sm:$0xff] %v1946
        %2447 = vst [vmem:[%s187 + $0xd50] sm:$0xff] %v1947
        %2448 = vst [vmem:[%s187 + $0xd58] sm:$0xff] %v1948
        %2449 = vst [vmem:[%s187 + $0xd60] sm:$0xff] %v1949
        %2450 = vst [vmem:[%s187 + $0xd68] sm:$0xff] %v1950
        %2451 = vst [vmem:[%s187 + $0xd70] sm:$0xff] %v1951
        %2452 = vst [vmem:[%s187 + $0xd78] sm:$0xff] %v1952
        %2453 = vst [vmem:[%s187 + $0xd80] sm:$0xff] %v1953
        %2454 = vst [vmem:[%s187 + $0xd88] sm:$0xff] %v1954
        %2455 = vst [vmem:[%s187 + $0xd90] sm:$0xff] %v1955
        %2456 = vst [vmem:[%s187 + $0xd98] sm:$0xff] %v1956
        %2457 = vst [vmem:[%s187 + $0xda0] sm:$0xff] %v1957
        %2458 = vst [vmem:[%s187 + $0xda8] sm:$0xff] %v1958
        %2459 = vst [vmem:[%s187 + $0xdb0] sm:$0xff] %v1959
        %2460 = vst [vmem:[%s187 + $0xdb8] sm:$0xff] %v1960
        %2461 = vst [vmem:[%s187 + $0xdc0] sm:$0xff] %v1961
        %2462 = vst [vmem:[%s187 + $0xdc8] sm:$0xff] %v1962
        %2463 = vst [vmem:[%s187 + $0xdd0] sm:$0xff] %v1963
        %2464 = vst [vmem:[%s187 + $0xdd8] sm:$0xff] %v1964
        %2465 = vst [vmem:[%s187 + $0xde0] sm:$0xff] %v1965
        %2466 = vst [vmem:[%s187 + $0xde8] sm:$0xff] %v1966
        %2467 = vst [vmem:[%s187 + $0xdf0] sm:$0xff] %v1967
        %2468 = vst [vmem:[%s187 + $0xdf8] sm:$0xff] %v1968
        %2469 = vst [vmem:[%s187 + $0xe00] sm:$0xff] %v1969
        %2470 = vst [vmem:[%s187 + $0xe08] sm:$0xff] %v1970
        %2471 = vst [vmem:[%s187 + $0xe10] sm:$0xff] %v1971
        %2472 = vst [vmem:[%s187 + $0xe18] sm:$0xff] %v1972
        %2473 = vst [vmem:[%s187 + $0xe20] sm:$0xff] %v1973
        %2474 = vst [vmem:[%s187 + $0xe28] sm:$0xff] %v1974
        %2475 = vst [vmem:[%s187 + $0xe30] sm:$0xff] %v1975
        %2476 = vst [vmem:[%s187 + $0xe38] sm:$0xff] %v1976
        %2477 = vst [vmem:[%s187 + $0xe40] sm:$0xff] %v1977
        %2478 = vst [vmem:[%s187 + $0xe48] sm:$0xff] %v1978
        %2479 = vst [vmem:[%s187 + $0xe50] sm:$0xff] %v1979
        %2480 = vst [vmem:[%s187 + $0xe58] sm:$0xff] %v1980
        %2481 = vst [vmem:[%s187 + $0xe60] sm:$0xff] %v1981
        %2482 = vst [vmem:[%s187 + $0xe68] sm:$0xff] %v1982
        %2483 = vst [vmem:[%s187 + $0xe70] sm:$0xff] %v1983
        %2484 = vst [vmem:[%s187 + $0xe78] sm:$0xff] %v1984
        %2485 = vst [vmem:[%s187 + $0xe80] sm:$0xff] %v1985
        %2486 = vst [vmem:[%s187 + $0xe88] sm:$0xff] %v1986
        %2487 = vst [vmem:[%s187 + $0xe90] sm:$0xff] %v1987
        %2488 = vst [vmem:[%s187 + $0xe98] sm:$0xff] %v1988
        %2489 = vst [vmem:[%s187 + $0xea0] sm:$0xff] %v1989
        %2490 = vst [vmem:[%s187 + $0xea8] sm:$0xff] %v1990
        %2491 = vst [vmem:[%s187 + $0xeb0] sm:$0xff] %v1991
        %2492 = vst [vmem:[%s187 + $0xeb8] sm:$0xff] %v1992
        %2493 = vst [vmem:[%s187 + $0xec0] sm:$0xff] %v1993
        %2494 = vst [vmem:[%s187 + $0xec8] sm:$0xff] %v1994
        %2495 = vst [vmem:[%s187 + $0xed0] sm:$0xff] %v1995
        %2496 = vst [vmem:[%s187 + $0xed8] sm:$0xff] %v1996
        %2497 = vst [vmem:[%s187 + $0xee0] sm:$0xff] %v1997
        %2498 = vst [vmem:[%s187 + $0xee8] sm:$0xff] %v1998
        %2499 = vst [vmem:[%s187 + $0xef0] sm:$0xff] %v1999
        %2500 = vst [vmem:[%s187 + $0xef8] sm:$0xff] %v2000
        %2501 = vst [vmem:[%s187 + $0xf00] sm:$0xff] %v2001
        %2502 = vst [vmem:[%s187 + $0xf08] sm:$0xff] %v2002
        %2503 = vst [vmem:[%s187 + $0xf10] sm:$0xff] %v2003
        %2504 = vst [vmem:[%s187 + $0xf18] sm:$0xff] %v2004
        %2505 = vst [vmem:[%s187 + $0xf20] sm:$0xff] %v2005
        %2506 = vst [vmem:[%s187 + $0xf28] sm:$0xff] %v2006
        %2507 = vst [vmem:[%s187 + $0xf30] sm:$0xff] %v2007
        %2508 = vst [vmem:[%s187 + $0xf38] sm:$0xff] %v2008
        %2509 = vst [vmem:[%s187 + $0xf40] sm:$0xff] %v2009
        %2510 = vst [vmem:[%s187 + $0xf48] sm:$0xff] %v2010
        %2511 = vst [vmem:[%s187 + $0xf50] sm:$0xff] %v2011
        %2512 = vst [vmem:[%s187 + $0xf58] sm:$0xff] %v2012
        %2513 = vst [vmem:[%s187 + $0xf60] sm:$0xff] %v2013
        %2514 = vst [vmem:[%s187 + $0xf68] sm:$0xff] %v2014
        %2515 = vst [vmem:[%s187 + $0xf70] sm:$0xff] %v2015
        %2516 = vst [vmem:[%s187 + $0xf78] sm:$0xff] %v2016
        %2517 = vst [vmem:[%s187 + $0xf80] sm:$0xff] %v2017
        %2518 = vst [vmem:[%s187 + $0xf88] sm:$0xff] %v2018
        %2519 = vst [vmem:[%s187 + $0xf90] sm:$0xff] %v2019
        %2520 = vst [vmem:[%s187 + $0xf98] sm:$0xff] %v2020
        %s2521 = sand.u32 %s97, 1
        %s2522 = scalar_lea.sflag [#allocation5], %s2521
        %s2523 = sand.u32 %s97, 1
        %s2524 = smul.addr %s2523, 4000
        %s2525 = scalar_lea.vmem [#allocation6], %s2524
        // Predicated region
        $region37: #{tpu_custom_call.1} parent=31 // pred_check
          %p2526 = pneg %p107
        $region38: #{tpu_custom_call.1} parent=31 // pred_check_branch
          %2528 = sbr.rel (%p2526) target = $region40
        $region39: #{tpu_custom_call.1} parent=31 // pred_region
          %s2529 = smul.u32 250, %s21
          %s2531 = ssub.s32 64000, 64000
          %2532 = vsyncadd %s2522, %s2531
          %s2533 = smul.addr %s2529, 128
          %s2534 = scalar_lea.hbm %s3, %s2533
          %s2535 = sshll.u32 %s2525, 4
          %s2536 = int_to_ptr.vmem [resolvable:$true] %s2535
          %2541 = dma.vmem_to_hbm [thread:$0]  %s2536, 64000, %s2534, %s2522, 32000, 160000, 2000
        $region40: #{tpu_custom_call.1} parent=31 // pred_fallthru
          _
      $region32: #{tpu_custom_call.1} parent=5 // pred_fallthru
        _
      %p2542 = scmp.le.s32.totalorder 2, %s16
      // Predicated region
      $region41: #{tpu_custom_call.1} parent=5 // pred_check
        %p2543 = pneg %p2542
      $region42: #{tpu_custom_call.1} parent=5 // pred_check_branch
        %2545 = sbr.rel (%p2543) target = $region44
      $region43: #{tpu_custom_call.1} parent=5 // pred_region
        %s2546 = ssub.s32 %s16, 2
        // Predicated region
        $region45: #{tpu_custom_call.1} parent=43 // pred_check
          %p2547 = pneg %p113
        $region46: #{tpu_custom_call.1} parent=43 // pred_check_branch
          %2549 = sbr.rel (%p2547) target = $region48
        $region47: #{tpu_custom_call.1} parent=43 // pred_region
          %s2550 = sand.u32 %s98, 1
          %s2551 = scalar_lea.sflag [#allocation5], %s2550
          %s2552 = sand.u32 %s98, 1
          %s2553 = smul.addr %s2552, 4000
          %s2554 = scalar_lea.vmem [#allocation6], %s2553
          %2555 = dma.done %s2551, 64000
        $region48: #{tpu_custom_call.1} parent=43 // pred_fallthru
          _
      $region44: #{tpu_custom_call.1} parent=5 // pred_fallthru
        _
    $region6: #{tpu_custom_call.1} parent=1 // loop_footer
      %s20 = sadd.s32 1, %s16
    $region7: #{tpu_custom_call.1} parent=1 // loop_footer_branch
      %15 = sbr.rel target = $region3
    $region8: #{tpu_custom_call.1} parent=1 // loop_exit
      _
    %2556 = vsyncpa [#allocation4], 1
    %s2557 = scalar_lea.sflag [#allocation4], 1
    %2558 = vsyncpa %s2557, 1
    %2559 = vsyncpa [#allocation5], 1
    %s2560 = scalar_lea.sflag [#allocation5], 1
    %2561 = vsyncpa %s2560, 1

</llo_original>
